<compile_context>
chip_gen: v6e
topology: v6e:2x2x1
jax: 0.10.0
libtpu: 0.0.40
codegen_flags: <defaults>
</compile_context>

<pallas_src>
import functools

import jax
import jax.numpy as jnp
from jax.experimental import pallas as pl
from jax.experimental.pallas import tpu as pltpu


# ------------------------------ Pallas kernel ------------------------------ #

def _bottleneck_kernel(
    xm1_ref, x0_ref, xp1_ref,      # temporal taps of padded x: (1, 1, S2, C) bf16
    w1_ref, b1m_ref,               # (3, C, P) bf16, (S2, P) f32 (row-masked bias)
    w2_ref, b2_ref,                # (9P, P) bf16, (1, P) f32
    w3_ref, b3_ref,                # (P, C) bf16, (1, C) f32
    o_ref,                         # (1, 1, M_out, C) f32
    slab_ref, col_ref,             # VMEM scratch: (S2, P) bf16, (M_out, 9P) bf16
    *, H, W,
):
    P = w1_ref.shape[2]
    Wp = W + 2
    M_out = H * Wp                 # over-computed conv2/conv3 rows (2 junk cols/row)

    t = pl.program_id(1)
    nT = pl.num_programs(1)
    # Temporal zero-padding handled by masking the tiny (C, P) edge weights
    # instead of the (S2, P) activations.
    m_prev = jnp.where(t > 0, 1.0, 0.0).astype(jnp.bfloat16)
    m_next = jnp.where(t < nT - 1, 1.0, 0.0).astype(jnp.bfloat16)

    # ---- conv1 (3,1,1) + BN1(folded, row-masked) + ReLU --------------------
    acc1 = jnp.dot(x0_ref[0, 0], w1_ref[1], preferred_element_type=jnp.float32)
    acc1 = acc1 + jnp.dot(xm1_ref[0, 0], w1_ref[0] * m_prev,
                          preferred_element_type=jnp.float32)
    acc1 = acc1 + jnp.dot(xp1_ref[0, 0], w1_ref[2] * m_next,
                          preferred_element_type=jnp.float32)
    # Bias is zero on spatial pad rows -> slab is exactly zero-padded for conv2.
    # Single aligned full-slab store; no scatter, no zeroing.
    slab_ref[...] = jnp.maximum(acc1 + b1m_ref[...], 0.0).astype(jnp.bfloat16)

    # ---- conv2 (1,3,3) + BN2(folded) + ReLU as ONE matmul with K = 9P -------
    # The 9 spatial taps are contiguous row-slices of the padded slab.
    for j in range(9):
        off = (j // 3) * Wp + (j % 3)
        col_ref[:, j * P:(j + 1) * P] = slab_ref[off:off + M_out, :]
    acc2 = jnp.dot(col_ref[...], w2_ref[...], preferred_element_type=jnp.float32)
    h2 = jnp.maximum(acc2 + b2_ref[...], 0.0).astype(jnp.bfloat16)   # (M_out, P)

    # ---- conv3 (1x1) + BN3(folded) + residual + ReLU ------------------------
    # Runs on the over-computed rows; junk columns are stripped in the wrapper.
    acc3 = jnp.dot(h2, w3_ref[...], preferred_element_type=jnp.float32)  # (M_out, C)
    res = x0_ref[0, 0, pl.ds(Wp + 1, M_out), :].astype(jnp.float32)      # residual
    o_ref[0, 0] = jnp.maximum(acc3 + b3_ref[...] + res, 0.0).astype(o_ref.dtype)


# -------------------------------- wrapper ----------------------------------- #

def _bn_fold(gamma, beta, mean, var, eps=1e-5):
    scale = gamma / jnp.sqrt(var + eps)
    bias = beta - mean * scale
    return scale, bias


def non_degenerate_bottleneck(x, params, planes):
    """x: (N, T, H, W, Cin) with Cin == 4*planes (downsample=None, stride=1)."""
    N, T, H, W, Cin = x.shape
    P = planes
    C = Cin
    assert Cin == 4 * planes, "residual add needs inplanes == planes*expansion"

    Hp, Wp = H + 2, W + 2
    S = Hp * Wp                        # padded spatial rows per frame
    S2 = ((S + 2 + 7) // 8) * 8        # +2 tap overhang, rounded to sublane mult
    M_out = H * Wp                     # over-computed output rows per frame

    s1, b1 = _bn_fold(*params["bn1"])
    s2, b2 = _bn_fold(*params["bn2"])
    s3, b3 = _bn_fold(*params["bn3"])

    # Fold BN scale into conv weights (per-output-channel = last dim), bf16 MXU.
    # torch layouts: w1 (P, C, 3), w2 (P, P, 3, 3), w3 (C, P).
    w1f = (jnp.transpose(params["w1"], (2, 1, 0)) * s1).astype(jnp.bfloat16)     # (3,C,P)
    w2cat = (jnp.transpose(params["w2"], (2, 3, 1, 0)).reshape(9 * P, P)
             * s2).astype(jnp.bfloat16)                                          # (9P,P)
    w3f = (jnp.transpose(params["w3"], (1, 0)) * s3).astype(jnp.bfloat16)        # (P,C)

    # BN1 bias masked per padded-slab row (zero on pad rows / overhang rows).
    row_mask = jnp.zeros((Hp, Wp), jnp.float32).at[1:H + 1, 1:W + 1].set(1.0)
    row_mask = jnp.pad(row_mask.reshape(S), (0, S2 - S))
    b1m = (row_mask[:, None] * b1[None, :]).astype(jnp.float32)                  # (S2,P)
    b2v = b2.reshape(1, P).astype(jnp.float32)
    b3v = b3.reshape(1, C).astype(jnp.float32)

    # Zero-pad spatially ONCE in the wrapper and flatten the padded grid.
    xp = jnp.pad(x, ((0, 0), (0, 0), (1, 1), (1, 1), (0, 0))).reshape(N, T, S, C)
    xp = jnp.pad(xp, ((0, 0), (0, 0), (0, S2 - S), (0, 0))).astype(jnp.bfloat16)

    def tap_spec(dt):
        return pl.BlockSpec(
            (1, 1, S2, C),
            lambda n, t, dt=dt: (n, jnp.clip(t + dt, 0, T - 1), 0, 0))

    def const_spec(shape):
        return pl.BlockSpec(shape, lambda n, t, _nd=len(shape): (0,) * _nd)

    kernel = functools.partial(_bottleneck_kernel, H=H, W=W)

    cost = pl.CostEstimate(
        flops=2 * N * T * (3 * S2 * C * P + M_out * 9 * P * P + M_out * P * C),
        transcendentals=0,
        bytes_accessed=N * T * (3 * S2 * C * 2 + M_out * C * 4)
        + (w1f.size + w2cat.size + w3f.size) * 2 + b1m.size * 4,
    )

    out = pl.pallas_call(
        kernel,
        out_shape=jax.ShapeDtypeStruct((N, T, M_out, C), jnp.float32),
        grid_spec=pltpu.PrefetchScalarGridSpec(
            num_scalar_prefetch=0,
            grid=(N, T),
            in_specs=[
                tap_spec(-1), tap_spec(0), tap_spec(+1),
                const_spec((3, C, P)), const_spec((S2, P)),
                const_spec((9 * P, P)), const_spec((1, P)),
                const_spec((P, C)), const_spec((1, C)),
            ],
            out_specs=pl.BlockSpec((1, 1, M_out, C), lambda n, t: (n, t, 0, 0)),
            scratch_shapes=[
                pltpu.VMEM((S2, P), jnp.bfloat16),           # conv1 output slab
                pltpu.VMEM((M_out, 9 * P), jnp.bfloat16),    # conv2 K-concat im2col
            ],
        ),
        compiler_params=pltpu.CompilerParams(
            dimension_semantics=("parallel", "parallel"),
            vmem_limit_bytes=32 * 1024 * 1024,
        ),
        cost_estimate=cost,
    )(xp, xp, xp, w1f, b1m, w2cat, b2v, w3f, b3v)

    # Strip the 2 over-computed junk columns per row and restore (N, T, H, W, C).
    return out.reshape(N, T, H, Wp, C)[:, :, :, :W, :]


# --------------------------- pure-JAX reference ----------------------------- #

def _reference(x, params, planes):
    dn = ("NDHWC", "DHWIO", "NDHWC")
    Pr = jax.lax.Precision.HIGHEST

    def bn(y, bn_params):
        s, b = _bn_fold(*bn_params)
        return y * s + b

    Cin = x.shape[-1]
    k1 = jnp.transpose(params["w1"], (2, 1, 0)).reshape(3, 1, 1, Cin, planes)
    k2 = jnp.transpose(params["w2"], (2, 3, 1, 0)).reshape(1, 3, 3, planes, planes)
    k3 = jnp.transpose(params["w3"], (1, 0)).reshape(1, 1, 1, planes, 4 * planes)

    o = jax.lax.conv_general_dilated(x, k1, (1, 1, 1),
                                     [(1, 1), (0, 0), (0, 0)],
                                     dimension_numbers=dn, precision=Pr)
    o = jnp.maximum(bn(o, params["bn1"]), 0.0)
    o = jax.lax.conv_general_dilated(o, k2, (1, 1, 1),
                                     [(0, 0), (1, 1), (1, 1)],
                                     dimension_numbers=dn, precision=Pr)
    o = jnp.maximum(bn(o, params["bn2"]), 0.0)
    o = jax.lax.conv_general_dilated(o, k3, (1, 1, 1),
                                     [(0, 0), (0, 0), (0, 0)],
                                     dimension_numbers=dn, precision=Pr)
    o = bn(o, params["bn3"]) + x
    return jnp.maximum(o, 0.0)


# ---------------------------------- main ------------------------------------ #

def _init_params(key, inplanes, planes):
    ks = jax.random.split(key, 16)
    expansion = 4

    def bn_params(k, c):
        k0, k1, k2, k3 = jax.random.split(k, 4)
        gamma = jax.random.normal(k0, (c,), jnp.float32) * 0.1 + 1.0
        beta = jax.random.normal(k1, (c,), jnp.float32) * 0.1
        mean = jax.random.normal(k2, (c,), jnp.float32) * 0.1
        var = jnp.abs(jax.random.normal(k3, (c,), jnp.float32)) + 0.5
        return (gamma, beta, mean, var)

    return {
        # conv3x1x1: torch weight (planes, inplanes, 3, 1, 1) -> (planes, inplanes, 3)
        "w1": jax.random.normal(ks[0], (planes, inplanes, 3), jnp.float32) * 0.1,
        "bn1": bn_params(ks[1], planes),
        # conv1x3x3: torch weight (planes, planes, 1, 3, 3) -> (planes, planes, 3, 3)
        "w2": jax.random.normal(ks[2], (planes, planes, 3, 3), jnp.float32) * 0.1,
        "bn2": bn_params(ks[3], planes),
        # conv1x1x1: torch weight (4*planes, planes, 1, 1, 1) -> (4*planes, planes)
        "w3": jax.random.normal(ks[4], (planes * expansion, planes), jnp.float32) * 0.1,
        "bn3": bn_params(ks[5], planes * expansion),
    }


if __name__ == "__main__":
    key = jax.random.PRNGKey(0)
    k_x, k_p = jax.random.split(key)

    planes = 4
    inplanes = planes * 4          # 16: residual add works with downsample=None
    N, T, H, W = 2, 4, 8, 8

    # PyTorch-equivalent NCDHW input would be (2, 16, 4, 8, 8); built directly
    # in the kernel's channels-last layout (N, T, H, W, C).
    x = jax.random.normal(k_x, (N, T, H, W, inplanes), jnp.float32)
    params = _init_params(k_p, inplanes, planes)

    out = jax.block_until_ready(non_degenerate_bottleneck(x, params, planes))
    ref = jax.block_until_ready(_reference(x, params, planes))

    assert out.shape == (N, T, H, W, planes * 4)
    # bf16 MXU operands + bf16 intermediates -> slightly looser tolerance than f32.
    assert jnp.allclose(out, ref, rtol=2e-2, atol=2e-2), (
        float(jnp.max(jnp.abs(out - ref))))

    print("KERNEL_OK")
</pallas_src>

<mosaic_0001>
module attributes {stable_mosaic.version = 11 : i64} {
  func.func @_bottleneck_kernel(%arg0: i32, %arg1: i32, %arg2: memref<1x1x104x16xbf16, #tpu.memory_space<vmem>>, %arg3: memref<1x1x104x16xbf16, #tpu.memory_space<vmem>>, %arg4: memref<1x1x104x16xbf16, #tpu.memory_space<vmem>>, %arg5: memref<3x16x4xbf16, #tpu.memory_space<vmem>>, %arg6: memref<104x4xf32, #tpu.memory_space<vmem>>, %arg7: memref<36x4xbf16, #tpu.memory_space<vmem>>, %arg8: memref<1x4xf32, #tpu.memory_space<vmem>>, %arg9: memref<4x16xbf16, #tpu.memory_space<vmem>>, %arg10: memref<1x16xf32, #tpu.memory_space<vmem>>, %arg11: memref<1x1x80x16xf32, #tpu.memory_space<vmem>>, %arg12: memref<104x4xbf16, #tpu.memory_space<vmem>>, %arg13: memref<80x36xbf16, #tpu.memory_space<vmem>>) attributes {dimension_semantics = [#tpu.dimension_semantics<parallel>, #tpu.dimension_semantics<parallel>], iteration_bounds = array<i64: 2, 4>, scalar_prefetch = 0 : i64, scratch_operands = 2 : i64, tpu.core_type = #tpu.core_type<tc>, window_params = [{transform_indices = @transform_0, window_bounds = array<i64: 1, 1, 104, 16>}, {transform_indices = @transform_1, window_bounds = array<i64: 1, 1, 104, 16>}, {transform_indices = @transform_2, window_bounds = array<i64: 1, 1, 104, 16>}, {pipeline_mode = #tpu.pipeline_mode<synchronous>, transform_indices = @transform_3, window_bounds = array<i64: 3, 16, 4>}, {pipeline_mode = #tpu.pipeline_mode<synchronous>, transform_indices = @transform_4, window_bounds = array<i64: 104, 4>}, {pipeline_mode = #tpu.pipeline_mode<synchronous>, transform_indices = @transform_5, window_bounds = array<i64: 36, 4>}, {pipeline_mode = #tpu.pipeline_mode<synchronous>, transform_indices = @transform_6, window_bounds = array<i64: 1, 4>}, {pipeline_mode = #tpu.pipeline_mode<synchronous>, transform_indices = @transform_7, window_bounds = array<i64: 4, 16>}, {pipeline_mode = #tpu.pipeline_mode<synchronous>, transform_indices = @transform_8, window_bounds = array<i64: 1, 16>}, {transform_indices = @transform_9, window_bounds = array<i64: 1, 1, 80, 16>}]} {
    %c0_i32 = arith.constant 0 : i32
    %0 = arith.cmpi sgt, %arg1, %c0_i32 : i32
    %cst = arith.constant 1.000000e+00 : f32
    %cst_0 = arith.constant 0.000000e+00 : f32
    %1 = arith.select %0, %cst, %cst_0 : f32
    %2 = arith.truncf %1 : f32 to bf16
    %c3_i32 = arith.constant 3 : i32
    %3 = arith.cmpi slt, %arg1, %c3_i32 : i32
    %cst_1 = arith.constant 1.000000e+00 : f32
    %cst_2 = arith.constant 0.000000e+00 : f32
    %4 = arith.select %3, %cst_1, %cst_2 : f32
    %5 = arith.truncf %4 : f32 to bf16
    %c0 = arith.constant 0 : index
    %c0_3 = arith.constant 0 : index
    %c0_4 = arith.constant 0 : index
    %c0_5 = arith.constant 0 : index
    %6 = vector.load %arg3[%c0, %c0_3, %c0_4, %c0_5] : memref<1x1x104x16xbf16, #tpu.memory_space<vmem>>, vector<1x1x104x16xbf16>
    %7 = vector.shape_cast %6 : vector<1x1x104x16xbf16> to vector<104x16xbf16>
    %c1 = arith.constant 1 : index
    %c0_6 = arith.constant 0 : index
    %c0_7 = arith.constant 0 : index
    %8 = vector.load %arg5[%c1, %c0_6, %c0_7] : memref<3x16x4xbf16, #tpu.memory_space<vmem>>, vector<1x16x4xbf16>
    %9 = vector.shape_cast %8 : vector<1x16x4xbf16> to vector<16x4xbf16>
    %cst_8 = arith.constant dense<0.000000e+00> : vector<104x4xf32>
    %10 = tpu.matmul %7, %9, %cst_8 {dimension_numbers = #tpu.dot_dimension_numbers<[1], [0], [0], [1], [0, 0, 1, 1], [], []>} : vector<104x16xbf16>, vector<16x4xbf16>, vector<104x4xf32> -> vector<104x4xf32>
    %c0_9 = arith.constant 0 : index
    %c0_10 = arith.constant 0 : index
    %c0_11 = arith.constant 0 : index
    %c0_12 = arith.constant 0 : index
    %11 = vector.load %arg2[%c0_9, %c0_10, %c0_11, %c0_12] : memref<1x1x104x16xbf16, #tpu.memory_space<vmem>>, vector<1x1x104x16xbf16>
    %12 = vector.shape_cast %11 : vector<1x1x104x16xbf16> to vector<104x16xbf16>
    %c0_13 = arith.constant 0 : index
    %c0_14 = arith.constant 0 : index
    %c0_15 = arith.constant 0 : index
    %13 = vector.load %arg5[%c0_13, %c0_14, %c0_15] : memref<3x16x4xbf16, #tpu.memory_space<vmem>>, vector<1x16x4xbf16>
    %14 = vector.shape_cast %13 : vector<1x16x4xbf16> to vector<16x4xbf16>
    %15 = vector.broadcast %2 : bf16 to vector<16x4xbf16>
    %16 = arith.mulf %14, %15 : vector<16x4xbf16>
    %cst_16 = arith.constant dense<0.000000e+00> : vector<104x4xf32>
    %17 = tpu.matmul %12, %16, %cst_16 {dimension_numbers = #tpu.dot_dimension_numbers<[1], [0], [0], [1], [0, 0, 1, 1], [], []>} : vector<104x16xbf16>, vector<16x4xbf16>, vector<104x4xf32> -> vector<104x4xf32>
    %18 = arith.addf %10, %17 : vector<104x4xf32>
    %c0_17 = arith.constant 0 : index
    %c0_18 = arith.constant 0 : index
    %c0_19 = arith.constant 0 : index
    %c0_20 = arith.constant 0 : index
    %19 = vector.load %arg4[%c0_17, %c0_18, %c0_19, %c0_20] : memref<1x1x104x16xbf16, #tpu.memory_space<vmem>>, vector<1x1x104x16xbf16>
    %20 = vector.shape_cast %19 : vector<1x1x104x16xbf16> to vector<104x16xbf16>
    %c2 = arith.constant 2 : index
    %c0_21 = arith.constant 0 : index
    %c0_22 = arith.constant 0 : index
    %21 = vector.load %arg5[%c2, %c0_21, %c0_22] : memref<3x16x4xbf16, #tpu.memory_space<vmem>>, vector<1x16x4xbf16>
    %22 = vector.shape_cast %21 : vector<1x16x4xbf16> to vector<16x4xbf16>
    %23 = vector.broadcast %5 : bf16 to vector<16x4xbf16>
    %24 = arith.mulf %22, %23 : vector<16x4xbf16>
    %cst_23 = arith.constant dense<0.000000e+00> : vector<104x4xf32>
    %25 = tpu.matmul %20, %24, %cst_23 {dimension_numbers = #tpu.dot_dimension_numbers<[1], [0], [0], [1], [0, 0, 1, 1], [], []>} : vector<104x16xbf16>, vector<16x4xbf16>, vector<104x4xf32> -> vector<104x4xf32>
    %26 = arith.addf %18, %25 : vector<104x4xf32>
    %c0_24 = arith.constant 0 : index
    %c0_25 = arith.constant 0 : index
    %27 = vector.load %arg6[%c0_24, %c0_25] : memref<104x4xf32, #tpu.memory_space<vmem>>, vector<104x4xf32>
    %28 = arith.addf %26, %27 : vector<104x4xf32>
    %cst_26 = arith.constant 0.000000e+00 : f32
    %29 = vector.broadcast %cst_26 : f32 to vector<104x4xf32>
    %30 = arith.maximumf %28, %29 : vector<104x4xf32>
    %31 = arith.truncf %30 : vector<104x4xf32> to vector<104x4xbf16>
    %c0_27 = arith.constant 0 : index
    %c0_28 = arith.constant 0 : index
    %32 = vector.load %arg12[%c0_27, %c0_28] : memref<104x4xbf16, #tpu.memory_space<vmem>>, vector<104x4xbf16>
    tpu.vector_store %arg12[%c0_27, %c0_28], %31 {strides = array<i32>} : memref<104x4xbf16, #tpu.memory_space<vmem>>, vector<104x4xbf16>,
    %c0_29 = arith.constant 0 : index
    %c0_30 = arith.constant 0 : index
    %33 = vector.load %arg12[%c0_29, %c0_30] : memref<104x4xbf16, #tpu.memory_space<vmem>>, vector<80x4xbf16>
    %c0_31 = arith.constant 0 : index
    %c0_32 = arith.constant 0 : index
    %34 = vector.load %arg13[%c0_31, %c0_32] : memref<80x36xbf16, #tpu.memory_space<vmem>>, vector<80x4xbf16>
    tpu.vector_store %arg13[%c0_31, %c0_32], %33 {strides = array<i32>} : memref<80x36xbf16, #tpu.memory_space<vmem>>, vector<80x4xbf16>,
    %c1_33 = arith.constant 1 : index
    %c0_34 = arith.constant 0 : index
    %35 = vector.load %arg12[%c1_33, %c0_34] : memref<104x4xbf16, #tpu.memory_space<vmem>>, vector<80x4xbf16>
    %c0_35 = arith.constant 0 : index
    %c4 = arith.constant 4 : index
    %36 = vector.load %arg13[%c0_35, %c4] : memref<80x36xbf16, #tpu.memory_space<vmem>>, vector<80x4xbf16>
    tpu.vector_store %arg13[%c0_35, %c4], %35 {strides = array<i32>} : memref<80x36xbf16, #tpu.memory_space<vmem>>, vector<80x4xbf16>,
    %c2_36 = arith.constant 2 : index
    %c0_37 = arith.constant 0 : index
    %37 = vector.load %arg12[%c2_36, %c0_37] : memref<104x4xbf16, #tpu.memory_space<vmem>>, vector<80x4xbf16>
    %c0_38 = arith.constant 0 : index
    %c8 = arith.constant 8 : index
    %38 = vector.load %arg13[%c0_38, %c8] : memref<80x36xbf16, #tpu.memory_space<vmem>>, vector<80x4xbf16>
    tpu.vector_store %arg13[%c0_38, %c8], %37 {strides = array<i32>} : memref<80x36xbf16, #tpu.memory_space<vmem>>, vector<80x4xbf16>,
    %c10 = arith.constant 10 : index
    %c0_39 = arith.constant 0 : index
    %39 = vector.load %arg12[%c10, %c0_39] : memref<104x4xbf16, #tpu.memory_space<vmem>>, vector<80x4xbf16>
    %c0_40 = arith.constant 0 : index
    %c12 = arith.constant 12 : index
    %40 = vector.load %arg13[%c0_40, %c12] : memref<80x36xbf16, #tpu.memory_space<vmem>>, vector<80x4xbf16>
    tpu.vector_store %arg13[%c0_40, %c12], %39 {strides = array<i32>} : memref<80x36xbf16, #tpu.memory_space<vmem>>, vector<80x4xbf16>,
    %c11 = arith.constant 11 : index
    %c0_41 = arith.constant 0 : index
    %41 = vector.load %arg12[%c11, %c0_41] : memref<104x4xbf16, #tpu.memory_space<vmem>>, vector<80x4xbf16>
    %c0_42 = arith.constant 0 : index
    %c16 = arith.constant 16 : index
    %42 = vector.load %arg13[%c0_42, %c16] : memref<80x36xbf16, #tpu.memory_space<vmem>>, vector<80x4xbf16>
    tpu.vector_store %arg13[%c0_42, %c16], %41 {strides = array<i32>} : memref<80x36xbf16, #tpu.memory_space<vmem>>, vector<80x4xbf16>,
    %c12_43 = arith.constant 12 : index
    %c0_44 = arith.constant 0 : index
    %43 = vector.load %arg12[%c12_43, %c0_44] : memref<104x4xbf16, #tpu.memory_space<vmem>>, vector<80x4xbf16>
    %c0_45 = arith.constant 0 : index
    %c20 = arith.constant 20 : index
    %44 = vector.load %arg13[%c0_45, %c20] : memref<80x36xbf16, #tpu.memory_space<vmem>>, vector<80x4xbf16>
    tpu.vector_store %arg13[%c0_45, %c20], %43 {strides = array<i32>} : memref<80x36xbf16, #tpu.memory_space<vmem>>, vector<80x4xbf16>,
    %c20_46 = arith.constant 20 : index
    %c0_47 = arith.constant 0 : index
    %45 = vector.load %arg12[%c20_46, %c0_47] : memref<104x4xbf16, #tpu.memory_space<vmem>>, vector<80x4xbf16>
    %c0_48 = arith.constant 0 : index
    %c24 = arith.constant 24 : index
    %46 = vector.load %arg13[%c0_48, %c24] : memref<80x36xbf16, #tpu.memory_space<vmem>>, vector<80x4xbf16>
    tpu.vector_store %arg13[%c0_48, %c24], %45 {strides = array<i32>} : memref<80x36xbf16, #tpu.memory_space<vmem>>, vector<80x4xbf16>,
    %c21 = arith.constant 21 : index
    %c0_49 = arith.constant 0 : index
    %47 = vector.load %arg12[%c21, %c0_49] : memref<104x4xbf16, #tpu.memory_space<vmem>>, vector<80x4xbf16>
    %c0_50 = arith.constant 0 : index
    %c28 = arith.constant 28 : index
    %48 = vector.load %arg13[%c0_50, %c28] : memref<80x36xbf16, #tpu.memory_space<vmem>>, vector<80x4xbf16>
    tpu.vector_store %arg13[%c0_50, %c28], %47 {strides = array<i32>} : memref<80x36xbf16, #tpu.memory_space<vmem>>, vector<80x4xbf16>,
    %c22 = arith.constant 22 : index
    %c0_51 = arith.constant 0 : index
    %49 = vector.load %arg12[%c22, %c0_51] : memref<104x4xbf16, #tpu.memory_space<vmem>>, vector<80x4xbf16>
    %c0_52 = arith.constant 0 : index
    %c32 = arith.constant 32 : index
    %50 = vector.load %arg13[%c0_52, %c32] : memref<80x36xbf16, #tpu.memory_space<vmem>>, vector<80x4xbf16>
    tpu.vector_store %arg13[%c0_52, %c32], %49 {strides = array<i32>} : memref<80x36xbf16, #tpu.memory_space<vmem>>, vector<80x4xbf16>,
    %c0_53 = arith.constant 0 : index
    %c0_54 = arith.constant 0 : index
    %51 = vector.load %arg13[%c0_53, %c0_54] : memref<80x36xbf16, #tpu.memory_space<vmem>>, vector<80x36xbf16>
    %c0_55 = arith.constant 0 : index
    %c0_56 = arith.constant 0 : index
    %52 = vector.load %arg7[%c0_55, %c0_56] : memref<36x4xbf16, #tpu.memory_space<vmem>>, vector<36x4xbf16>
    %cst_57 = arith.constant dense<0.000000e+00> : vector<80x4xf32>
    %53 = tpu.matmul %51, %52, %cst_57 {dimension_numbers = #tpu.dot_dimension_numbers<[1], [0], [0], [1], [0, 0, 1, 1], [], []>} : vector<80x36xbf16>, vector<36x4xbf16>, vector<80x4xf32> -> vector<80x4xf32>
    %c0_58 = arith.constant 0 : index
    %c0_59 = arith.constant 0 : index
    %54 = vector.load %arg8[%c0_58, %c0_59] : memref<1x4xf32, #tpu.memory_space<vmem>>, vector<1x4xf32>
    %55 = vector.broadcast %54 : vector<1x4xf32> to vector<80x4xf32>
    %56 = arith.addf %53, %55 : vector<80x4xf32>
    %cst_60 = arith.constant 0.000000e+00 : f32
    %57 = vector.broadcast %cst_60 : f32 to vector<80x4xf32>
    %58 = arith.maximumf %56, %57 : vector<80x4xf32>
    %59 = arith.truncf %58 : vector<80x4xf32> to vector<80x4xbf16>
    %c0_61 = arith.constant 0 : index
    %c0_62 = arith.constant 0 : index
    %60 = vector.load %arg9[%c0_61, %c0_62] : memref<4x16xbf16, #tpu.memory_space<vmem>>, vector<4x16xbf16>
    %cst_63 = arith.constant dense<0.000000e+00> : vector<80x16xf32>
    %61 = tpu.matmul %59, %60, %cst_63 {dimension_numbers = #tpu.dot_dimension_numbers<[1], [0], [0], [1], [0, 0, 1, 1], [], []>} : vector<80x4xbf16>, vector<4x16xbf16>, vector<80x16xf32> -> vector<80x16xf32>
    %c0_64 = arith.constant 0 : index
    %c0_65 = arith.constant 0 : index
    %c11_66 = arith.constant 11 : index
    %c0_67 = arith.constant 0 : index
    %62 = vector.load %arg3[%c0_64, %c0_65, %c11_66, %c0_67] : memref<1x1x104x16xbf16, #tpu.memory_space<vmem>>, vector<1x1x80x16xbf16>
    %63 = vector.shape_cast %62 : vector<1x1x80x16xbf16> to vector<80x16xbf16>
    %64 = arith.extf %63 : vector<80x16xbf16> to vector<80x16xf32>
    %c0_68 = arith.constant 0 : index
    %c0_69 = arith.constant 0 : index
    %65 = vector.load %arg10[%c0_68, %c0_69] : memref<1x16xf32, #tpu.memory_space<vmem>>, vector<1x16xf32>
    %66 = vector.broadcast %65 : vector<1x16xf32> to vector<80x16xf32>
    %67 = arith.addf %61, %66 : vector<80x16xf32>
    %68 = arith.addf %67, %64 : vector<80x16xf32>
    %cst_70 = arith.constant 0.000000e+00 : f32
    %69 = vector.broadcast %cst_70 : f32 to vector<80x16xf32>
    %70 = arith.maximumf %68, %69 : vector<80x16xf32>
    %c0_71 = arith.constant 0 : index
    %c0_72 = arith.constant 0 : index
    %c0_73 = arith.constant 0 : index
    %c0_74 = arith.constant 0 : index
    %71 = vector.load %arg11[%c0_71, %c0_72, %c0_73, %c0_74] : memref<1x1x80x16xf32, #tpu.memory_space<vmem>>, vector<1x1x80x16xf32>
    %72 = vector.shape_cast %71 : vector<1x1x80x16xf32> to vector<80x16xf32>
    %73 = vector.shape_cast %70 : vector<80x16xf32> to vector<1x1x80x16xf32>
    tpu.vector_store %arg11[%c0_71, %c0_72, %c0_73, %c0_74], %73 {strides = array<i32>} : memref<1x1x80x16xf32, #tpu.memory_space<vmem>>, vector<1x1x80x16xf32>,
    return
  }
  func.func @transform_0(%arg0: i32, %arg1: i32) -> (i32, i32, i32, i32) {
    %c-1_i32 = arith.constant -1 : i32
    %0 = arith.addi %arg1, %c-1_i32 : i32
    %c0_i32 = arith.constant 0 : i32
    %c3_i32 = arith.constant 3 : i32
    %1 = arith.maxsi %c0_i32, %0 : i32
    %2 = arith.minsi %c3_i32, %1 : i32
    %c0_i32_0 = arith.constant 0 : i32
    %c0_i32_1 = arith.constant 0 : i32
    %c0_i32_2 = arith.constant 0 : i32
    return %arg0, %2, %c0_i32_0, %c0_i32_1 : i32, i32, i32, i32
  }
  func.func @transform_1(%arg0: i32, %arg1: i32) -> (i32, i32, i32, i32) {
    %c0_i32 = arith.constant 0 : i32
    %0 = arith.addi %arg1, %c0_i32 : i32
    %c0_i32_0 = arith.constant 0 : i32
    %c3_i32 = arith.constant 3 : i32
    %1 = arith.maxsi %c0_i32_0, %0 : i32
    %2 = arith.minsi %c3_i32, %1 : i32
    %c0_i32_1 = arith.constant 0 : i32
    %c0_i32_2 = arith.constant 0 : i32
    %c0_i32_3 = arith.constant 0 : i32
    return %arg0, %2, %c0_i32_1, %c0_i32_2 : i32, i32, i32, i32
  }
  func.func @transform_2(%arg0: i32, %arg1: i32) -> (i32, i32, i32, i32) {
    %c1_i32 = arith.constant 1 : i32
    %0 = arith.addi %arg1, %c1_i32 : i32
    %c0_i32 = arith.constant 0 : i32
    %c3_i32 = arith.constant 3 : i32
    %1 = arith.maxsi %c0_i32, %0 : i32
    %2 = arith.minsi %c3_i32, %1 : i32
    %c0_i32_0 = arith.constant 0 : i32
    %c0_i32_1 = arith.constant 0 : i32
    %c0_i32_2 = arith.constant 0 : i32
    return %arg0, %2, %c0_i32_0, %c0_i32_1 : i32, i32, i32, i32
  }
  func.func @transform_3(%arg0: i32, %arg1: i32) -> (i32, i32, i32) {
    %c0_i32 = arith.constant 0 : i32
    %c0_i32_0 = arith.constant 0 : i32
    %c0_i32_1 = arith.constant 0 : i32
    %c0_i32_2 = arith.constant 0 : i32
    return %c0_i32, %c0_i32_0, %c0_i32_1 : i32, i32, i32
  }
  func.func @transform_4(%arg0: i32, %arg1: i32) -> (i32, i32) {
    %c0_i32 = arith.constant 0 : i32
    %c0_i32_0 = arith.constant 0 : i32
    %c0_i32_1 = arith.constant 0 : i32
    return %c0_i32, %c0_i32_0 : i32, i32
  }
  func.func @transform_5(%arg0: i32, %arg1: i32) -> (i32, i32) {
    %c0_i32 = arith.constant 0 : i32
    %c0_i32_0 = arith.constant 0 : i32
    %c0_i32_1 = arith.constant 0 : i32
    return %c0_i32, %c0_i32_0 : i32, i32
  }
  func.func @transform_6(%arg0: i32, %arg1: i32) -> (i32, i32) {
    %c0_i32 = arith.constant 0 : i32
    %c0_i32_0 = arith.constant 0 : i32
    %c0_i32_1 = arith.constant 0 : i32
    return %c0_i32, %c0_i32_0 : i32, i32
  }
  func.func @transform_7(%arg0: i32, %arg1: i32) -> (i32, i32) {
    %c0_i32 = arith.constant 0 : i32
    %c0_i32_0 = arith.constant 0 : i32
    %c0_i32_1 = arith.constant 0 : i32
    return %c0_i32, %c0_i32_0 : i32, i32
  }
  func.func @transform_8(%arg0: i32, %arg1: i32) -> (i32, i32) {
    %c0_i32 = arith.constant 0 : i32
    %c0_i32_0 = arith.constant 0 : i32
    %c0_i32_1 = arith.constant 0 : i32
    return %c0_i32, %c0_i32_0 : i32, i32
  }
  func.func @transform_9(%arg0: i32, %arg1: i32) -> (i32, i32, i32, i32) {
    %c0_i32 = arith.constant 0 : i32
    %c0_i32_0 = arith.constant 0 : i32
    %c0_i32_1 = arith.constant 0 : i32
    return %arg0, %arg1, %c0_i32, %c0_i32_0 : i32, i32, i32, i32
  }
}

</mosaic_0001>

<llo_original>
// kernel: tpu_custom_call.1
$region0: #{tpu_custom_call.1}
  #allocation0 [shape = 'u32[]', space=smem, size = 0x4, offset = 0x4, fixed_abs, tag = 'smem constant byte address 0x4 - core index']
  #allocation1 [shape = 'u32[144,128]{1,0:T(1,128)}', space=vmem, size = 0x12000, scoped, tag = 'internal scratch']
  #allocation2 [shape = 'bf16[104,4]{1,0:T(8,128)(2,1)}', space=vmem, size = 0x6800, scoped, tag = 'scratch operand']
  #allocation3 [shape = 'bf16[80,36]{1,0:T(8,128)(2,1)}', space=vmem, size = 0x5000, scoped, tag = 'scratch operand']
  %s0 = inlined_call_operand.vmem [shape: bf16[2,4,104,16], index: 0, kind: input, shape index: {}]
  %s1 = inlined_call_operand.vmem [shape: bf16[2,4,104,16], index: 1, kind: input, shape index: {}]
  %s2 = inlined_call_operand.vmem [shape: bf16[2,4,104,16], index: 2, kind: input, shape index: {}]
  %s3 = inlined_call_operand.vmem [shape: bf16[3,16,4], index: 3, kind: input, shape index: {}]
  %s4 = inlined_call_operand.vmem [shape: f32[104,4], index: 4, kind: input, shape index: {}]
  %s5 = inlined_call_operand.vmem [shape: bf16[36,4], index: 5, kind: input, shape index: {}]
  %s6 = inlined_call_operand.vmem [shape: f32[1,4], index: 6, kind: input, shape index: {}]
  %s7 = inlined_call_operand.vmem [shape: bf16[4,16], index: 7, kind: input, shape index: {}]
  %s8 = inlined_call_operand.vmem [shape: f32[1,16], index: 8, kind: input, shape index: {}]
  %s9 = inlined_call_operand.vmem [shape: f32[2,4,80,16], index: 9, kind: output, shape index: {}]
  %s10 = sld [smem:[#allocation0]]
  $region69: #{tpu_custom_call.1} parent=0
    _
  %s12 = ssub.s32 1, %s10
  %s13 = scalar_select 0, %s12, %s10
  loop: start=0, step=1, limit=10
  $region2: #{tpu_custom_call.1} parent=0 // loop_pre_header
    _
  $region3: #{tpu_custom_call.1} parent=0 // loop_header
    %s15 = sphi 0, %s19
    %p16 = scmp.ge.s32.totalorder %s15, 10
    %s22 = sphi 0, %s34
    %s23 = sphi 0, %s30
    %s24 = sphi 0, %s22
    %s25 = sphi 0, %s23
    %s26 = sphi 0, %s24
    %s27 = sphi 0, %s25
    %s49 = sphi 0, %s51
    %s52 = sphi 0, %s49
    %s53 = sphi 0, %s52
    %s69 = sphi 0, %s53
    %s85 = sphi 0, %s87
    %s88 = sphi 0, %s85
    %s89 = sphi 0, %s88
    %s105 = sphi 0, %s89
    %s123 = sphi 0, %s125
    %s126 = sphi 0, %s123
    %s127 = sphi 0, %s126
    %s143 = sphi 0, %s127
    %s147 = sphi 0, %s147
    %s149 = sphi 0, %s147
    %s150 = sphi 0, %s149
    %s164 = sphi 0, %s150
    %s168 = sphi 0, %s168
    %s170 = sphi 0, %s168
    %s171 = sphi 0, %s170
    %s185 = sphi 0, %s171
    %s189 = sphi 0, %s189
    %s191 = sphi 0, %s189
    %s192 = sphi 0, %s191
    %s206 = sphi 0, %s192
    %s210 = sphi 0, %s210
    %s212 = sphi 0, %s210
    %s213 = sphi 0, %s212
    %s227 = sphi 0, %s213
    %s231 = sphi 0, %s231
    %s233 = sphi 0, %s231
    %s234 = sphi 0, %s233
    %s248 = sphi 0, %s234
    %s252 = sphi 0, %s252
    %s254 = sphi 0, %s252
    %s255 = sphi 0, %s254
    %s269 = sphi 0, %s255
    %s277 = sphi 0, %s279
    %s280 = sphi 0, %s277
    %s281 = sphi 0, %s280
    %s297 = sphi 0, %s281
  $region4: #{tpu_custom_call.1} parent=0 // loop_header_branch
    %18 = sbr.rel (%p16) target = $region8
  $region5: #{tpu_custom_call.1} parent=0 // loop_body
    %s20 = ssub.s32 %s15, 1
    %s21 = ssub.s32 %s15, 2
    %s28 = sadd.s32 1, %s23
    %p29 = scmp.ge.s32.totalorder %s28, 4
    %s30 = scalar_select %p29, 0, %s28
    %s31 = sadd.s32 1, %s22
    %s32 = scalar_select %p29, %s31, %s22
    %p33 = scmp.ge.s32.totalorder %s32, 2
    %s34 = scalar_select %p33, 0, %s32
    %s35 = sadd.s32 %s23, 4294967295
    %p36 = scmp.gt.s32.totalorder %s35, 0
    %s37 = scalar_select %p36, %s35, 0
    %p38 = scmp.lt.s32.totalorder %s37, 3
    %s39 = scalar_select %p38, %s37, 3
    %s40 = sadd.s32 %s30, 4294967295
    %p41 = scmp.gt.s32.totalorder %s40, 0
    %s42 = scalar_select %p41, %s40, 0
    %p43 = scmp.lt.s32.totalorder %s42, 3
    %s44 = scalar_select %p43, %s42, 3
    %s45 = ssub.s32 %s22, %s34
    %s46 = ssub.s32 %s39, %s44
    %s47 = sor.u32 %s45, %s46
    %p48 = scmp.eq.s32.totalorder %s47, 0
    %s50 = sadd.s32 %s49, 1
    %s51 = scalar_select %p48, %s49, %s50
    %p54 = pneg %p48
    %p55 = scmp.eq.s32.totalorder %s15, 7
    %p56 = por %p54, %p55
    %p57 = scmp.ne.s32.totalorder %s49, %s52
    %p58 = scmp.eq.s32.totalorder %s15, 0
    %p59 = por %p57, %p58
    %p60 = scmp.ne.s32.totalorder %s49, %s52
    %p61 = scmp.eq.s32.totalorder %s20, 7
    %p62 = por %p60, %p61
    %p63 = scmp.ne.s32.totalorder %s52, %s53
    %p64 = scmp.eq.s32.totalorder %s20, 0
    %p65 = por %p63, %p64
    %p66 = scmp.ne.s32.totalorder %s52, %s53
    %p67 = scmp.eq.s32.totalorder %s21, 7
    %p68 = por %p66, %p67
    %p70 = scmp.ne.s32.totalorder %s53, %s69
    %p71 = scmp.eq.s32.totalorder %s21, 0
    %p72 = por %p70, %p71
    %p73 = scmp.gt.s32.totalorder %s23, 0
    %s74 = scalar_select %p73, %s23, 0
    %p75 = scmp.lt.s32.totalorder %s74, 3
    %s76 = scalar_select %p75, %s74, 3
    %p77 = scmp.gt.s32.totalorder %s30, 0
    %s78 = scalar_select %p77, %s30, 0
    %p79 = scmp.lt.s32.totalorder %s78, 3
    %s80 = scalar_select %p79, %s78, 3
    %s81 = ssub.s32 %s22, %s34
    %s82 = ssub.s32 %s76, %s80
    %s83 = sor.u32 %s81, %s82
    %p84 = scmp.eq.s32.totalorder %s83, 0
    %s86 = sadd.s32 %s85, 1
    %s87 = scalar_select %p84, %s85, %s86
    %p90 = pneg %p84
    %p91 = scmp.eq.s32.totalorder %s15, 7
    %p92 = por %p90, %p91
    %p93 = scmp.ne.s32.totalorder %s85, %s88
    %p94 = scmp.eq.s32.totalorder %s15, 0
    %p95 = por %p93, %p94
    %p96 = scmp.ne.s32.totalorder %s85, %s88
    %p97 = scmp.eq.s32.totalorder %s20, 7
    %p98 = por %p96, %p97
    %p99 = scmp.ne.s32.totalorder %s88, %s89
    %p100 = scmp.eq.s32.totalorder %s20, 0
    %p101 = por %p99, %p100
    %p102 = scmp.ne.s32.totalorder %s88, %s89
    %p103 = scmp.eq.s32.totalorder %s21, 7
    %p104 = por %p102, %p103
    %p106 = scmp.ne.s32.totalorder %s89, %s105
    %p107 = scmp.eq.s32.totalorder %s21, 0
    %p108 = por %p106, %p107
    %s109 = sadd.s32 %s23, 1
    %p110 = scmp.gt.s32.totalorder %s109, 0
    %s111 = scalar_select %p110, %s109, 0
    %p112 = scmp.lt.s32.totalorder %s111, 3
    %s113 = scalar_select %p112, %s111, 3
    %s114 = sadd.s32 %s30, 1
    %p115 = scmp.gt.s32.totalorder %s114, 0
    %s116 = scalar_select %p115, %s114, 0
    %p117 = scmp.lt.s32.totalorder %s116, 3
    %s118 = scalar_select %p117, %s116, 3
    %s119 = ssub.s32 %s22, %s34
    %s120 = ssub.s32 %s113, %s118
    %s121 = sor.u32 %s119, %s120
    %p122 = scmp.eq.s32.totalorder %s121, 0
    %s124 = sadd.s32 %s123, 1
    %s125 = scalar_select %p122, %s123, %s124
    %p128 = pneg %p122
    %p129 = scmp.eq.s32.totalorder %s15, 7
    %p130 = por %p128, %p129
    %p131 = scmp.ne.s32.totalorder %s123, %s126
    %p132 = scmp.eq.s32.totalorder %s15, 0
    %p133 = por %p131, %p132
    %p134 = scmp.ne.s32.totalorder %s123, %s126
    %p135 = scmp.eq.s32.totalorder %s20, 7
    %p136 = por %p134, %p135
    %p137 = scmp.ne.s32.totalorder %s126, %s127
    %p138 = scmp.eq.s32.totalorder %s20, 0
    %p139 = por %p137, %p138
    %p140 = scmp.ne.s32.totalorder %s126, %s127
    %p141 = scmp.eq.s32.totalorder %s21, 7
    %p142 = por %p140, %p141
    %p144 = scmp.ne.s32.totalorder %s127, %s143
    %p145 = scmp.eq.s32.totalorder %s21, 0
    %p146 = por %p144, %p145
    %s148 = sadd.s32 %s147, 1
    %p151 = scmp.eq.s32.totalorder %s15, 7
    %p152 = scmp.ne.s32.totalorder %s147, %s149
    %p153 = scmp.eq.s32.totalorder %s15, 0
    %p154 = por %p152, %p153
    %p155 = scmp.ne.s32.totalorder %s147, %s149
    %p156 = scmp.eq.s32.totalorder %s20, 7
    %p157 = por %p155, %p156
    %p158 = scmp.ne.s32.totalorder %s149, %s150
    %p159 = scmp.eq.s32.totalorder %s20, 0
    %p160 = por %p158, %p159
    %p161 = scmp.ne.s32.totalorder %s149, %s150
    %p162 = scmp.eq.s32.totalorder %s21, 7
    %p163 = por %p161, %p162
    %p165 = scmp.ne.s32.totalorder %s150, %s164
    %p166 = scmp.eq.s32.totalorder %s21, 0
    %p167 = por %p165, %p166
    %s169 = sadd.s32 %s168, 1
    %p172 = scmp.eq.s32.totalorder %s15, 7
    %p173 = scmp.ne.s32.totalorder %s168, %s170
    %p174 = scmp.eq.s32.totalorder %s15, 0
    %p175 = por %p173, %p174
    %p176 = scmp.ne.s32.totalorder %s168, %s170
    %p177 = scmp.eq.s32.totalorder %s20, 7
    %p178 = por %p176, %p177
    %p179 = scmp.ne.s32.totalorder %s170, %s171
    %p180 = scmp.eq.s32.totalorder %s20, 0
    %p181 = por %p179, %p180
    %p182 = scmp.ne.s32.totalorder %s170, %s171
    %p183 = scmp.eq.s32.totalorder %s21, 7
    %p184 = por %p182, %p183
    %p186 = scmp.ne.s32.totalorder %s171, %s185
    %p187 = scmp.eq.s32.totalorder %s21, 0
    %p188 = por %p186, %p187
    %s190 = sadd.s32 %s189, 1
    %p193 = scmp.eq.s32.totalorder %s15, 7
    %p194 = scmp.ne.s32.totalorder %s189, %s191
    %p195 = scmp.eq.s32.totalorder %s15, 0
    %p196 = por %p194, %p195
    %p197 = scmp.ne.s32.totalorder %s189, %s191
    %p198 = scmp.eq.s32.totalorder %s20, 7
    %p199 = por %p197, %p198
    %p200 = scmp.ne.s32.totalorder %s191, %s192
    %p201 = scmp.eq.s32.totalorder %s20, 0
    %p202 = por %p200, %p201
    %p203 = scmp.ne.s32.totalorder %s191, %s192
    %p204 = scmp.eq.s32.totalorder %s21, 7
    %p205 = por %p203, %p204
    %p207 = scmp.ne.s32.totalorder %s192, %s206
    %p208 = scmp.eq.s32.totalorder %s21, 0
    %p209 = por %p207, %p208
    %s211 = sadd.s32 %s210, 1
    %p214 = scmp.eq.s32.totalorder %s15, 7
    %p215 = scmp.ne.s32.totalorder %s210, %s212
    %p216 = scmp.eq.s32.totalorder %s15, 0
    %p217 = por %p215, %p216
    %p218 = scmp.ne.s32.totalorder %s210, %s212
    %p219 = scmp.eq.s32.totalorder %s20, 7
    %p220 = por %p218, %p219
    %p221 = scmp.ne.s32.totalorder %s212, %s213
    %p222 = scmp.eq.s32.totalorder %s20, 0
    %p223 = por %p221, %p222
    %p224 = scmp.ne.s32.totalorder %s212, %s213
    %p225 = scmp.eq.s32.totalorder %s21, 7
    %p226 = por %p224, %p225
    %p228 = scmp.ne.s32.totalorder %s213, %s227
    %p229 = scmp.eq.s32.totalorder %s21, 0
    %p230 = por %p228, %p229
    %s232 = sadd.s32 %s231, 1
    %p235 = scmp.eq.s32.totalorder %s15, 7
    %p236 = scmp.ne.s32.totalorder %s231, %s233
    %p237 = scmp.eq.s32.totalorder %s15, 0
    %p238 = por %p236, %p237
    %p239 = scmp.ne.s32.totalorder %s231, %s233
    %p240 = scmp.eq.s32.totalorder %s20, 7
    %p241 = por %p239, %p240
    %p242 = scmp.ne.s32.totalorder %s233, %s234
    %p243 = scmp.eq.s32.totalorder %s20, 0
    %p244 = por %p242, %p243
    %p245 = scmp.ne.s32.totalorder %s233, %s234
    %p246 = scmp.eq.s32.totalorder %s21, 7
    %p247 = por %p245, %p246
    %p249 = scmp.ne.s32.totalorder %s234, %s248
    %p250 = scmp.eq.s32.totalorder %s21, 0
    %p251 = por %p249, %p250
    %s253 = sadd.s32 %s252, 1
    %p256 = scmp.eq.s32.totalorder %s15, 7
    %p257 = scmp.ne.s32.totalorder %s252, %s254
    %p258 = scmp.eq.s32.totalorder %s15, 0
    %p259 = por %p257, %p258
    %p260 = scmp.ne.s32.totalorder %s252, %s254
    %p261 = scmp.eq.s32.totalorder %s20, 7
    %p262 = por %p260, %p261
    %p263 = scmp.ne.s32.totalorder %s254, %s255
    %p264 = scmp.eq.s32.totalorder %s20, 0
    %p265 = por %p263, %p264
    %p266 = scmp.ne.s32.totalorder %s254, %s255
    %p267 = scmp.eq.s32.totalorder %s21, 7
    %p268 = por %p266, %p267
    %p270 = scmp.ne.s32.totalorder %s255, %s269
    %p271 = scmp.eq.s32.totalorder %s21, 0
    %p272 = por %p270, %p271
    %s273 = ssub.s32 %s22, %s34
    %s274 = ssub.s32 %s23, %s30
    %s275 = sor.u32 %s273, %s274
    %p276 = scmp.eq.s32.totalorder %s275, 0
    %s278 = sadd.s32 %s277, 1
    %s279 = scalar_select %p276, %s277, %s278
    %p282 = pneg %p276
    %p283 = scmp.eq.s32.totalorder %s15, 7
    %p284 = por %p282, %p283
    %p285 = scmp.ne.s32.totalorder %s277, %s280
    %p286 = scmp.eq.s32.totalorder %s15, 0
    %p287 = por %p285, %p286
    %p288 = scmp.ne.s32.totalorder %s277, %s280
    %p289 = scmp.eq.s32.totalorder %s20, 7
    %p290 = por %p288, %p289
    %p291 = scmp.ne.s32.totalorder %s280, %s281
    %p292 = scmp.eq.s32.totalorder %s20, 0
    %p293 = por %p291, %p292
    %p294 = scmp.ne.s32.totalorder %s280, %s281
    %p295 = scmp.eq.s32.totalorder %s21, 7
    %p296 = por %p294, %p295
    %p298 = scmp.ne.s32.totalorder %s281, %s297
    %p299 = scmp.eq.s32.totalorder %s21, 0
    %p300 = por %p298, %p299
    %p301 = scmp.le.s32.totalorder 1, %s15
    %p302 = scmp.lt.s32.totalorder %s15, 9
    %p303 = pnand %p301, %p302
    %p304 = pneg %p303
    // Predicated region
    $region9: #{tpu_custom_call.1} parent=5 // pred_check
      _
    $region10: #{tpu_custom_call.1} parent=5 // pred_check_branch
      %306 = sbr.rel (%p303) target = $region12
    $region11: #{tpu_custom_call.1} parent=5 // pred_region
      %s307 = ssub.s32 %s15, 1
      // Predicated region
      $region13: #{tpu_custom_call.1} parent=11 // pred_check
        %p308 = pneg %p160
      $region14: #{tpu_custom_call.1} parent=11 // pred_check_branch
        %310 = sbr.rel (%p308) target = $region16
      $region15: #{tpu_custom_call.1} parent=11 // pred_region
        _
      $region16: #{tpu_custom_call.1} parent=11 // pred_fallthru
        _
      // Predicated region
      $region17: #{tpu_custom_call.1} parent=11 // pred_check
        %p311 = pneg %p181
      $region18: #{tpu_custom_call.1} parent=11 // pred_check_branch
        %313 = sbr.rel (%p311) target = $region20
      $region19: #{tpu_custom_call.1} parent=11 // pred_region
        _
      $region20: #{tpu_custom_call.1} parent=11 // pred_fallthru
        _
      // Predicated region
      $region21: #{tpu_custom_call.1} parent=11 // pred_check
        %p314 = pneg %p202
      $region22: #{tpu_custom_call.1} parent=11 // pred_check_branch
        %316 = sbr.rel (%p314) target = $region24
      $region23: #{tpu_custom_call.1} parent=11 // pred_region
        _
      $region24: #{tpu_custom_call.1} parent=11 // pred_fallthru
        _
      // Predicated region
      $region25: #{tpu_custom_call.1} parent=11 // pred_check
        %p317 = pneg %p223
      $region26: #{tpu_custom_call.1} parent=11 // pred_check_branch
        %319 = sbr.rel (%p317) target = $region28
      $region27: #{tpu_custom_call.1} parent=11 // pred_region
        _
      $region28: #{tpu_custom_call.1} parent=11 // pred_fallthru
        _
      // Predicated region
      $region29: #{tpu_custom_call.1} parent=11 // pred_check
        %p320 = pneg %p244
      $region30: #{tpu_custom_call.1} parent=11 // pred_check_branch
        %322 = sbr.rel (%p320) target = $region32
      $region31: #{tpu_custom_call.1} parent=11 // pred_region
        _
      $region32: #{tpu_custom_call.1} parent=11 // pred_fallthru
        _
      // Predicated region
      $region33: #{tpu_custom_call.1} parent=11 // pred_check
        %p323 = pneg %p265
      $region34: #{tpu_custom_call.1} parent=11 // pred_check_branch
        %325 = sbr.rel (%p323) target = $region36
      $region35: #{tpu_custom_call.1} parent=11 // pred_region
        _
      $region36: #{tpu_custom_call.1} parent=11 // pred_fallthru
        _
    $region12: #{tpu_custom_call.1} parent=5 // pred_fallthru
      _
    %p326 = scmp.lt.s32.totalorder %s15, 8
    // Predicated region
    $region37: #{tpu_custom_call.1} parent=5 // pred_check
      %p327 = pneg %p326
    $region38: #{tpu_custom_call.1} parent=5 // pred_check_branch
      %329 = sbr.rel (%p327) target = $region40
    $region39: #{tpu_custom_call.1} parent=5 // pred_region
      // Predicated region
      $region41: #{tpu_custom_call.1} parent=39 // pred_check
        %p330 = pneg %p59
      $region42: #{tpu_custom_call.1} parent=39 // pred_check_branch
        %332 = sbr.rel (%p330) target = $region44
      $region43: #{tpu_custom_call.1} parent=39 // pred_region
        %s333 = sadd.s32 %s23, 4294967295
        %p334 = scmp.gt.s32.totalorder %s333, 0
        %s335 = scalar_select %p334, %s333, 0
        %p336 = scmp.lt.s32.totalorder %s335, 3
        %s337 = scalar_select %p336, %s335, 3
        %p338 = scmp.lt.s32.totalorder %s22, 1
        %s339 = scalar_select %p338, %s22, 1
        %p340 = scmp.lt.s32.totalorder %s337, 3
        %s341 = scalar_select %p340, %s337, 3
        %s342 = smul.addr %s341, 13
        %s343 = smul.addr %s339, 52
        %s344 = sadd.s32 %s342, %s343
        %s345 = smul.addr %s344, 4
        %s346 = scalar_lea.vmem %s0, %s345
        %s347 = sadd.s32 %s23, 4294967295
        %p348 = scmp.gt.s32.totalorder %s347, 0
        %s349 = scalar_select %p348, %s347, 0
        %p350 = scmp.lt.s32.totalorder %s349, 3
        %s351 = scalar_select %p350, %s349, 3
      $region44: #{tpu_custom_call.1} parent=39 // pred_fallthru
        _
      // Predicated region
      $region45: #{tpu_custom_call.1} parent=39 // pred_check
        %p352 = pneg %p95
      $region46: #{tpu_custom_call.1} parent=39 // pred_check_branch
        %354 = sbr.rel (%p352) target = $region48
      $region47: #{tpu_custom_call.1} parent=39 // pred_region
        %p355 = scmp.gt.s32.totalorder %s23, 0
        %s356 = scalar_select %p355, %s23, 0
        %p357 = scmp.lt.s32.totalorder %s356, 3
        %s358 = scalar_select %p357, %s356, 3
        %p359 = scmp.lt.s32.totalorder %s22, 1
        %s360 = scalar_select %p359, %s22, 1
        %p361 = scmp.lt.s32.totalorder %s358, 3
        %s362 = scalar_select %p361, %s358, 3
        %s363 = smul.addr %s362, 13
        %s364 = smul.addr %s360, 52
        %s365 = sadd.s32 %s363, %s364
        %s366 = smul.addr %s365, 4
        %s367 = scalar_lea.vmem %s1, %s366
        %p368 = scmp.gt.s32.totalorder %s23, 0
        %s369 = scalar_select %p368, %s23, 0
        %p370 = scmp.lt.s32.totalorder %s369, 3
        %s371 = scalar_select %p370, %s369, 3
      $region48: #{tpu_custom_call.1} parent=39 // pred_fallthru
        _
      // Predicated region
      $region49: #{tpu_custom_call.1} parent=39 // pred_check
        %p372 = pneg %p133
      $region50: #{tpu_custom_call.1} parent=39 // pred_check_branch
        %374 = sbr.rel (%p372) target = $region52
      $region51: #{tpu_custom_call.1} parent=39 // pred_region
        %s375 = sadd.s32 %s23, 1
        %p376 = scmp.gt.s32.totalorder %s375, 0
        %s377 = scalar_select %p376, %s375, 0
        %p378 = scmp.lt.s32.totalorder %s377, 3
        %s379 = scalar_select %p378, %s377, 3
        %p380 = scmp.lt.s32.totalorder %s22, 1
        %s381 = scalar_select %p380, %s22, 1
        %p382 = scmp.lt.s32.totalorder %s379, 3
        %s383 = scalar_select %p382, %s379, 3
        %s384 = smul.addr %s383, 13
        %s385 = smul.addr %s381, 52
        %s386 = sadd.s32 %s384, %s385
        %s387 = smul.addr %s386, 4
        %s388 = scalar_lea.vmem %s2, %s387
        %s389 = sadd.s32 %s23, 1
        %p390 = scmp.gt.s32.totalorder %s389, 0
        %s391 = scalar_select %p390, %s389, 0
        %p392 = scmp.lt.s32.totalorder %s391, 3
        %s393 = scalar_select %p392, %s391, 3
      $region52: #{tpu_custom_call.1} parent=39 // pred_fallthru
        _
    $region40: #{tpu_custom_call.1} parent=5 // pred_fallthru
      _
    %p394 = scmp.le.s32.totalorder 1, %s15
    %p395 = scmp.lt.s32.totalorder %s15, 9
    %p396 = pnand %p394, %p395
    %p397 = pneg %p396
    // Predicated region
    $region53: #{tpu_custom_call.1} parent=5 // pred_check
      _
    $region54: #{tpu_custom_call.1} parent=5 // pred_check_branch
      %399 = sbr.rel (%p396) target = $region56
    $region55: #{tpu_custom_call.1} parent=5 // pred_region
      %s400 = ssub.s32 %s15, 1
      %s401 = sadd.s32 %s25, 4294967295
      %p402 = scmp.gt.s32.totalorder %s401, 0
      %s403 = scalar_select %p402, %s401, 0
      %p404 = scmp.lt.s32.totalorder %s403, 3
      %s405 = scalar_select %p404, %s403, 3
      %p406 = scmp.lt.s32.totalorder %s24, 1
      %s407 = scalar_select %p406, %s24, 1
      %p408 = scmp.lt.s32.totalorder %s405, 3
      %s409 = scalar_select %p408, %s405, 3
      %s410 = smul.addr %s409, 13
      %s411 = smul.addr %s407, 52
      %s412 = sadd.s32 %s410, %s411
      %s413 = smul.addr %s412, 4
      %s414 = scalar_lea.vmem %s0, %s413
      %p415 = pneg %p65
      %p416 = pneg %p62
      %p417 = scmp.gt.s32.totalorder %s25, 0
      %s418 = scalar_select %p417, %s25, 0
      %p419 = scmp.lt.s32.totalorder %s418, 3
      %s420 = scalar_select %p419, %s418, 3
      %p421 = scmp.lt.s32.totalorder %s24, 1
      %s422 = scalar_select %p421, %s24, 1
      %p423 = scmp.lt.s32.totalorder %s420, 3
      %s424 = scalar_select %p423, %s420, 3
      %s425 = smul.addr %s424, 13
      %s426 = smul.addr %s422, 52
      %s427 = sadd.s32 %s425, %s426
      %s428 = smul.addr %s427, 4
      %s429 = scalar_lea.vmem %s1, %s428
      %p430 = pneg %p101
      %p431 = pneg %p98
      %s432 = sadd.s32 %s25, 1
      %p433 = scmp.gt.s32.totalorder %s432, 0
      %s434 = scalar_select %p433, %s432, 0
      %p435 = scmp.lt.s32.totalorder %s434, 3
      %s436 = scalar_select %p435, %s434, 3
      %p437 = scmp.lt.s32.totalorder %s24, 1
      %s438 = scalar_select %p437, %s24, 1
      %p439 = scmp.lt.s32.totalorder %s436, 3
      %s440 = scalar_select %p439, %s436, 3
      %s441 = smul.addr %s440, 13
      %s442 = smul.addr %s438, 52
      %s443 = sadd.s32 %s441, %s442
      %s444 = smul.addr %s443, 4
      %s445 = scalar_lea.vmem %s2, %s444
      %p446 = pneg %p139
      %p447 = pneg %p136
      %p448 = pneg %p160
      %p449 = pneg %p157
      %p450 = pneg %p181
      %p451 = pneg %p178
      %p452 = pneg %p202
      %p453 = pneg %p199
      %p454 = pneg %p223
      %p455 = pneg %p220
      %p456 = pneg %p244
      %p457 = pneg %p241
      %p458 = pneg %p265
      %p459 = pneg %p262
      %p460 = pneg %p293
      %p461 = pneg %p290
      %p462 = scmp.lt.s32.totalorder %s24, 1
      %s463 = scalar_select %p462, %s24, 1
      %p464 = scmp.lt.s32.totalorder %s25, 3
      %s465 = scalar_select %p464, %s25, 3
      %s466 = smul.addr %s465, 10
      %s467 = smul.addr %s463, 40
      %s468 = sadd.s32 %s466, %s467
      %s469 = smul.addr %s468, 8
      %s470 = scalar_lea.vmem %s9, %s469
      %s471 = sadd.s32 %s25, 4294967295
      %p472 = scmp.gt.s32.totalorder %s471, 0
      %s473 = scalar_select %p472, %s471, 0
      %p474 = scmp.lt.s32.totalorder %s473, 3
      %s475 = scalar_select %p474, %s473, 3
      %p476 = scmp.lt.s32.totalorder %s24, 1
      %s477 = scalar_select %p476, %s24, 1
      %p478 = scmp.lt.s32.totalorder %s475, 3
      %s479 = scalar_select %p478, %s475, 3
      %s480 = smul.addr %s479, 13
      %s481 = smul.addr %s477, 52
      %s482 = sadd.s32 %s480, %s481
      %s483 = smul.addr %s482, 4
      %s484 = scalar_lea.vmem %s0, %s483
      %s485 = sadd.s32 %s25, 4294967295
      %p486 = scmp.gt.s32.totalorder %s485, 0
      %s487 = scalar_select %p486, %s485, 0
      %p488 = scmp.lt.s32.totalorder %s487, 3
      %s489 = scalar_select %p488, %s487, 3
      %p490 = scmp.gt.s32.totalorder %s25, 0
      %s491 = scalar_select %p490, %s25, 0
      %p492 = scmp.lt.s32.totalorder %s491, 3
      %s493 = scalar_select %p492, %s491, 3
      %p494 = scmp.lt.s32.totalorder %s24, 1
      %s495 = scalar_select %p494, %s24, 1
      %p496 = scmp.lt.s32.totalorder %s493, 3
      %s497 = scalar_select %p496, %s493, 3
      %s498 = smul.addr %s497, 13
      %s499 = smul.addr %s495, 52
      %s500 = sadd.s32 %s498, %s499
      %s501 = smul.addr %s500, 4
      %s502 = scalar_lea.vmem %s1, %s501
      %p503 = scmp.gt.s32.totalorder %s25, 0
      %s504 = scalar_select %p503, %s25, 0
      %p505 = scmp.lt.s32.totalorder %s504, 3
      %s506 = scalar_select %p505, %s504, 3
      %s507 = sadd.s32 %s25, 1
      %p508 = scmp.gt.s32.totalorder %s507, 0
      %s509 = scalar_select %p508, %s507, 0
      %p510 = scmp.lt.s32.totalorder %s509, 3
      %s511 = scalar_select %p510, %s509, 3
      %p512 = scmp.lt.s32.totalorder %s24, 1
      %s513 = scalar_select %p512, %s24, 1
      %p514 = scmp.lt.s32.totalorder %s511, 3
      %s515 = scalar_select %p514, %s511, 3
      %s516 = smul.addr %s515, 13
      %s517 = smul.addr %s513, 52
      %s518 = sadd.s32 %s516, %s517
      %s519 = smul.addr %s518, 4
      %s520 = scalar_lea.vmem %s2, %s519
      %s521 = sadd.s32 %s25, 1
      %p522 = scmp.gt.s32.totalorder %s521, 0
      %s523 = scalar_select %p522, %s521, 0
      %p524 = scmp.lt.s32.totalorder %s523, 3
      %s525 = scalar_select %p524, %s523, 3
      %p526 = scmp.lt.s32.totalorder %s24, 1
      %s527 = scalar_select %p526, %s24, 1
      %p528 = scmp.lt.s32.totalorder %s25, 3
      %s529 = scalar_select %p528, %s25, 3
      %s530 = smul.addr %s529, 10
      %s531 = smul.addr %s527, 40
      %s532 = sadd.s32 %s530, %s531
      %s533 = smul.addr %s532, 8
      %s534 = scalar_lea.vmem %s9, %s533
      %p536 = scmp.gt.s32.totalorder %s25, 0
      %s537 = scalar_select %p536, 1.0, 0.0
      %p539 = scmp.ne.f32.partialorder %s537, %s537
      %s540 = sshrl.u32 %s537, 16
      %s541 = sand.u32 %s540, 1
      %s542 = sadd.s32 32767, %s541
      %s543 = sadd.s32 %s537, %s542
      %s544 = sand.u32 %s543, 4294901760
      %s545 = scalar_select %p539, 2143289344, %s544
      %s547 = sshrl.u32 %s545, 16
      %p548 = scmp.lt.s32.totalorder %s25, 3
      %s549 = scalar_select %p548, 1.0, 0.0
      %p551 = scmp.ne.f32.partialorder %s549, %s549
      %s552 = sshrl.u32 %s549, 16
      %s553 = sand.u32 %s552, 1
      %s554 = sadd.s32 32767, %s553
      %s555 = sadd.s32 %s549, %s554
      %s556 = sand.u32 %s555, 4294901760
      %s557 = scalar_select %p551, 2143289344, %s556
      %s559 = sshrl.u32 %s557, 16
      %v560 = vld [vmem:[%s502] sm:$0xf]
      %v561 = vld [vmem:[%s502 + $0x4] sm:$0xf]
      %v562 = vld [vmem:[%s502 + $0x8] sm:$0xf]
      %v563 = vld [vmem:[%s502 + $0xc] sm:$0xf]
      %v564 = vld [vmem:[%s502 + $0x10] sm:$0xf]
      %v565 = vld [vmem:[%s502 + $0x14] sm:$0xf]
      %v566 = vld [vmem:[%s502 + $0x18] sm:$0xf]
      %v567 = vld [vmem:[%s502 + $0x1c] sm:$0xf]
      %v568 = vld [vmem:[%s502 + $0x20] sm:$0xf]
      %v569 = vld [vmem:[%s502 + $0x24] sm:$0xf]
      %v570 = vld [vmem:[%s502 + $0x28] sm:$0xf]
      %v571 = vld [vmem:[%s502 + $0x2c] sm:$0xf]
      %v572 = vld [vmem:[%s502 + $0x30] sm:$0xf]
      %s573 = scalar_lea.vmem %s3, 8
      %v574 = vld [vmem:[%s573] sm:$0xf]
      %v575 = vld [vmem:[%s573 + $0x4] sm:$0xf]
      %v576 = vld [vmem:[%s484] sm:$0xf]
      %v577 = vld [vmem:[%s484 + $0x4] sm:$0xf]
      %v578 = vld [vmem:[%s484 + $0x8] sm:$0xf]
      %v579 = vld [vmem:[%s484 + $0xc] sm:$0xf]
      %v580 = vld [vmem:[%s484 + $0x10] sm:$0xf]
      %v581 = vld [vmem:[%s484 + $0x14] sm:$0xf]
      %v582 = vld [vmem:[%s484 + $0x18] sm:$0xf]
      %v583 = vld [vmem:[%s484 + $0x1c] sm:$0xf]
      %v584 = vld [vmem:[%s484 + $0x20] sm:$0xf]
      %v585 = vld [vmem:[%s484 + $0x24] sm:$0xf]
      %v586 = vld [vmem:[%s484 + $0x28] sm:$0xf]
      %v587 = vld [vmem:[%s484 + $0x2c] sm:$0xf]
      %v588 = vld [vmem:[%s484 + $0x30] sm:$0xf]
      %v589 = vld [vmem:[%s3] sm:$0xf]
      %v590 = vld [vmem:[%s3 + $0x4] sm:$0xf]
      %s591 = sshll.u32 %s547, 16
      %s592 = sor.u32 %s547, %s591
      %v593 = vstv %s592
      %v595 = vmul.bf16 %v589, %v593
      %v596 = vmul.bf16 %v590, %v593
      %v610 = vunpack.c.l.b16 %v576
      %v611 = vunpack.c.l.b16 %v577
      %v612 = vunpack.c.l.b16 %v578
      %v613 = vunpack.c.l.b16 %v579
      %v614 = vunpack.c.l.b16 %v580
      %v615 = vunpack.c.l.b16 %v581
      %v616 = vunpack.c.l.b16 %v582
      %v617 = vunpack.c.l.b16 %v583
      %v618 = vunpack.c.l.b16 %v584
      %v619 = vunpack.c.l.b16 %v585
      %v620 = vunpack.c.l.b16 %v586
      %v621 = vunpack.c.l.b16 %v587
      %v622 = vunpack.c.l.b16 %v588
      %v623 = vpack.c.b16 %v611, %v610
      %v624 = vpack.c.b16 %v613, %v612
      %v625 = vpack.c.b16 %v615, %v614
      %v626 = vpack.c.b16 %v617, %v616
      %v627 = vpack.c.b16 %v619, %v618
      %v628 = vpack.c.b16 %v621, %v620
      %v629 = vpack.c.b16 %v622, %v622
      %v632 = vunpack.c.l.b16 %v595
      %v633 = vunpack.c.l.b16 %v596
      %v634 = vpack.c.b16 %v633, %v632
      %vm636 = vcmask 130048
      %v638 = vsel %vm636, %v623, 0
      %v641 = vsel %vm636, %v624, 0
      %v644 = vsel %vm636, %v625, 0
      %v647 = vsel %vm636, %v626, 0
      %v650 = vsel %vm636, %v627, 0
      %v653 = vsel %vm636, %v628, 0
      %v656 = vsel %vm636, %v629, 0
      %658 = vmatprep.subr.bf16.mxu0 0
      %659 = vmatpush1.bf16.msra.mxu0 0
      %660 = vmatprep.subr.bf16.mxu0 0
      %661 = vmatpush1.bf16.msra.mxu0 0
      %662 = vmatprep.subr.bf16.mxu0 0
      %663 = vmatpush1.bf16.msra.mxu0 0
      %664 = vmatprep.subr.bf16.mxu0 0
      %665 = vmatpush1.bf16.msra.mxu0 0
      %666 = vmatprep.subr.bf16.mxu0 0
      %667 = vmatpush1.bf16.msra.mxu0 0
      %668 = vmatprep.subr.bf16.mxu0 0
      %669 = vmatpush1.bf16.msra.mxu0 0
      %670 = vmatprep.subr.bf16.mxu0 0
      %671 = vmatpush1.bf16.msra.mxu0 0
      %672 = vmatprep.subr.bf16.mxu0 0
      %673 = vmatpush1.bf16.msra.mxu0 %v634
      %674 = vmatprep.subr.bf16.mxu0 0
      %675 = vmatpush2.bf16.msra.mxu0 0
      %676 = vmatprep.subr.bf16.mxu0 0
      %677 = vmatpush2.bf16.msra.mxu0 0
      %678 = vmatprep.subr.bf16.mxu0 0
      %679 = vmatpush2.bf16.msra.mxu0 0
      %680 = vmatprep.subr.bf16.mxu0 0
      %681 = vmatpush2.bf16.msra.mxu0 0
      %682 = vmatprep.subr.bf16.mxu0 0
      %683 = vmatpush2.bf16.msra.mxu0 0
      %684 = vmatprep.subr.bf16.mxu0 0
      %685 = vmatpush2.bf16.msra.mxu0 0
      %686 = vmatprep.subr.bf16.mxu0 0
      %687 = vmatpush2.bf16.msra.mxu0 0
      %688 = vmatprep.subr.bf16.mxu0 0
      %689 = vmatpush2.bf16.msra.mxu0 0
      %690 = vmatprep.mubr.bf16.mxu0 0
      %691 = vmatmul.mubr.bf16.gmra.mxu0 %v638
      %v692 = vpop.f32.mrf.mxu0
      %v693 = vadd.f32 0.0, %v692
      %v694 = vpop.f32.mrf.mxu0
      %v695 = vpop.f32.mrf.mxu0
      %v696 = vadd.f32 0.0, %v695
      %v697 = vpop.f32.mrf.mxu0
      %698 = vmatprep.mubr.bf16.mxu0 0
      %699 = vmatmul.mubr.bf16.gmra.mxu0 %v641
      %v700 = vpop.f32.mrf.mxu0
      %v701 = vadd.f32 0.0, %v700
      %v702 = vpop.f32.mrf.mxu0
      %v703 = vpop.f32.mrf.mxu0
      %v704 = vadd.f32 0.0, %v703
      %v705 = vpop.f32.mrf.mxu0
      %706 = vmatprep.mubr.bf16.mxu0 0
      %707 = vmatmul.mubr.bf16.gmra.mxu0 %v644
      %v708 = vpop.f32.mrf.mxu0
      %v709 = vadd.f32 0.0, %v708
      %v710 = vpop.f32.mrf.mxu0
      %v711 = vpop.f32.mrf.mxu0
      %v712 = vadd.f32 0.0, %v711
      %v713 = vpop.f32.mrf.mxu0
      %714 = vmatprep.mubr.bf16.mxu0 0
      %715 = vmatmul.mubr.bf16.gmra.mxu0 %v647
      %v716 = vpop.f32.mrf.mxu0
      %v717 = vadd.f32 0.0, %v716
      %v718 = vpop.f32.mrf.mxu0
      %v719 = vpop.f32.mrf.mxu0
      %v720 = vadd.f32 0.0, %v719
      %v721 = vpop.f32.mrf.mxu0
      %722 = vmatprep.mubr.bf16.mxu0 0
      %723 = vmatmul.mubr.bf16.gmra.mxu0 %v650
      %v724 = vpop.f32.mrf.mxu0
      %v725 = vadd.f32 0.0, %v724
      %v726 = vpop.f32.mrf.mxu0
      %v727 = vpop.f32.mrf.mxu0
      %v728 = vadd.f32 0.0, %v727
      %v729 = vpop.f32.mrf.mxu0
      %730 = vmatprep.mubr.bf16.mxu0 0
      %731 = vmatmul.mubr.bf16.gmra.mxu0 %v653
      %v732 = vpop.f32.mrf.mxu0
      %v733 = vadd.f32 0.0, %v732
      %v734 = vpop.f32.mrf.mxu0
      %v735 = vpop.f32.mrf.mxu0
      %v736 = vadd.f32 0.0, %v735
      %v737 = vpop.f32.mrf.mxu0
      %738 = vmatprep.mubr.bf16.mxu0 0
      %739 = vmatmul.mubr.bf16.gmra.mxu0 %v656
      %v740 = vpop.f32.mrf.mxu0
      %v741 = vadd.f32 0.0, %v740
      %v742 = vpop.f32.mrf.mxu0
      %v743 = vpop.f32.mrf.mxu0
      %v744 = vpop.f32.mrf.mxu0
      %745 = vdwg.mxu0
      %v759 = vunpack.c.l.b16 %v560
      %v760 = vunpack.c.l.b16 %v561
      %v761 = vunpack.c.l.b16 %v562
      %v762 = vunpack.c.l.b16 %v563
      %v763 = vunpack.c.l.b16 %v564
      %v764 = vunpack.c.l.b16 %v565
      %v765 = vunpack.c.l.b16 %v566
      %v766 = vunpack.c.l.b16 %v567
      %v767 = vunpack.c.l.b16 %v568
      %v768 = vunpack.c.l.b16 %v569
      %v769 = vunpack.c.l.b16 %v570
      %v770 = vunpack.c.l.b16 %v571
      %v771 = vunpack.c.l.b16 %v572
      %v772 = vpack.c.b16 %v760, %v759
      %v773 = vpack.c.b16 %v762, %v761
      %v774 = vpack.c.b16 %v764, %v763
      %v775 = vpack.c.b16 %v766, %v765
      %v776 = vpack.c.b16 %v768, %v767
      %v777 = vpack.c.b16 %v770, %v769
      %v778 = vpack.c.b16 %v771, %v771
      %v781 = vunpack.c.l.b16 %v574
      %v782 = vunpack.c.l.b16 %v575
      %v783 = vpack.c.b16 %v782, %v781
      %v786 = vsel %vm636, %v772, 0
      %v789 = vsel %vm636, %v773, 0
      %v792 = vsel %vm636, %v774, 0
      %v795 = vsel %vm636, %v775, 0
      %v798 = vsel %vm636, %v776, 0
      %v801 = vsel %vm636, %v777, 0
      %v804 = vsel %vm636, %v778, 0
      %806 = vmatprep.subr.bf16.mxu0 0
      %807 = vmatpush1.bf16.msra.mxu0 0
      %808 = vmatprep.subr.bf16.mxu0 0
      %809 = vmatpush1.bf16.msra.mxu0 0
      %810 = vmatprep.subr.bf16.mxu0 0
      %811 = vmatpush1.bf16.msra.mxu0 0
      %812 = vmatprep.subr.bf16.mxu0 0
      %813 = vmatpush1.bf16.msra.mxu0 0
      %814 = vmatprep.subr.bf16.mxu0 0
      %815 = vmatpush1.bf16.msra.mxu0 0
      %816 = vmatprep.subr.bf16.mxu0 0
      %817 = vmatpush1.bf16.msra.mxu0 0
      %818 = vmatprep.subr.bf16.mxu0 0
      %819 = vmatpush1.bf16.msra.mxu0 0
      %820 = vmatprep.subr.bf16.mxu0 0
      %821 = vmatpush1.bf16.msra.mxu0 %v783
      %822 = vmatprep.subr.bf16.mxu0 0
      %823 = vmatpush2.bf16.msra.mxu0 0
      %824 = vmatprep.subr.bf16.mxu0 0
      %825 = vmatpush2.bf16.msra.mxu0 0
      %826 = vmatprep.subr.bf16.mxu0 0
      %827 = vmatpush2.bf16.msra.mxu0 0
      %828 = vmatprep.subr.bf16.mxu0 0
      %829 = vmatpush2.bf16.msra.mxu0 0
      %830 = vmatprep.subr.bf16.mxu0 0
      %831 = vmatpush2.bf16.msra.mxu0 0
      %832 = vmatprep.subr.bf16.mxu0 0
      %833 = vmatpush2.bf16.msra.mxu0 0
      %834 = vmatprep.subr.bf16.mxu0 0
      %835 = vmatpush2.bf16.msra.mxu0 0
      %836 = vmatprep.subr.bf16.mxu0 0
      %837 = vmatpush2.bf16.msra.mxu0 0
      %838 = vmatprep.mubr.bf16.mxu0 0
      %839 = vmatmul.mubr.bf16.gmra.mxu0 %v786
      %v840 = vpop.f32.mrf.mxu0
      %v841 = vadd.f32 %v693, %v840
      %v842 = vpop.f32.mrf.mxu0
      %v843 = vpop.f32.mrf.mxu0
      %v844 = vadd.f32 %v696, %v843
      %v845 = vpop.f32.mrf.mxu0
      %846 = vmatprep.mubr.bf16.mxu0 0
      %847 = vmatmul.mubr.bf16.gmra.mxu0 %v789
      %v848 = vpop.f32.mrf.mxu0
      %v849 = vadd.f32 %v701, %v848
      %v850 = vpop.f32.mrf.mxu0
      %v851 = vpop.f32.mrf.mxu0
      %v852 = vadd.f32 %v704, %v851
      %v853 = vpop.f32.mrf.mxu0
      %854 = vmatprep.mubr.bf16.mxu0 0
      %855 = vmatmul.mubr.bf16.gmra.mxu0 %v792
      %v856 = vpop.f32.mrf.mxu0
      %v857 = vadd.f32 %v709, %v856
      %v858 = vpop.f32.mrf.mxu0
      %v859 = vpop.f32.mrf.mxu0
      %v860 = vadd.f32 %v712, %v859
      %v861 = vpop.f32.mrf.mxu0
      %862 = vmatprep.mubr.bf16.mxu0 0
      %863 = vmatmul.mubr.bf16.gmra.mxu0 %v795
      %v864 = vpop.f32.mrf.mxu0
      %v865 = vadd.f32 %v717, %v864
      %v866 = vpop.f32.mrf.mxu0
      %v867 = vpop.f32.mrf.mxu0
      %v868 = vadd.f32 %v720, %v867
      %v869 = vpop.f32.mrf.mxu0
      %870 = vmatprep.mubr.bf16.mxu0 0
      %871 = vmatmul.mubr.bf16.gmra.mxu0 %v798
      %v872 = vpop.f32.mrf.mxu0
      %v873 = vadd.f32 %v725, %v872
      %v874 = vpop.f32.mrf.mxu0
      %v875 = vpop.f32.mrf.mxu0
      %v876 = vadd.f32 %v728, %v875
      %v877 = vpop.f32.mrf.mxu0
      %878 = vmatprep.mubr.bf16.mxu0 0
      %879 = vmatmul.mubr.bf16.gmra.mxu0 %v801
      %v880 = vpop.f32.mrf.mxu0
      %v881 = vadd.f32 %v733, %v880
      %v882 = vpop.f32.mrf.mxu0
      %v883 = vpop.f32.mrf.mxu0
      %v884 = vadd.f32 %v736, %v883
      %v885 = vpop.f32.mrf.mxu0
      %886 = vmatprep.mubr.bf16.mxu0 0
      %887 = vmatmul.mubr.bf16.gmra.mxu0 %v804
      %v888 = vpop.f32.mrf.mxu0
      %v889 = vadd.f32 %v741, %v888
      %v890 = vpop.f32.mrf.mxu0
      %v891 = vpop.f32.mrf.mxu0
      %v892 = vpop.f32.mrf.mxu0
      %893 = vdwg.mxu0
      %v894 = vld [vmem:[%s520] sm:$0xf]
      %v895 = vld [vmem:[%s520 + $0x4] sm:$0xf]
      %v896 = vld [vmem:[%s520 + $0x8] sm:$0xf]
      %v897 = vld [vmem:[%s520 + $0xc] sm:$0xf]
      %v898 = vld [vmem:[%s520 + $0x10] sm:$0xf]
      %v899 = vld [vmem:[%s520 + $0x14] sm:$0xf]
      %v900 = vld [vmem:[%s520 + $0x18] sm:$0xf]
      %v901 = vld [vmem:[%s520 + $0x1c] sm:$0xf]
      %v902 = vld [vmem:[%s520 + $0x20] sm:$0xf]
      %v903 = vld [vmem:[%s520 + $0x24] sm:$0xf]
      %v904 = vld [vmem:[%s520 + $0x28] sm:$0xf]
      %v905 = vld [vmem:[%s520 + $0x2c] sm:$0xf]
      %v906 = vld [vmem:[%s520 + $0x30] sm:$0xf]
      %s907 = scalar_lea.vmem %s3, 16
      %v908 = vld [vmem:[%s907] sm:$0xf]
      %v909 = vld [vmem:[%s907 + $0x4] sm:$0xf]
      %s910 = sshll.u32 %s559, 16
      %s911 = sor.u32 %s559, %s910
      %v912 = vstv %s911
      %v914 = vmul.bf16 %v908, %v912
      %v915 = vmul.bf16 %v909, %v912
      %v929 = vunpack.c.l.b16 %v894
      %v930 = vunpack.c.l.b16 %v895
      %v931 = vunpack.c.l.b16 %v896
      %v932 = vunpack.c.l.b16 %v897
      %v933 = vunpack.c.l.b16 %v898
      %v934 = vunpack.c.l.b16 %v899
      %v935 = vunpack.c.l.b16 %v900
      %v936 = vunpack.c.l.b16 %v901
      %v937 = vunpack.c.l.b16 %v902
      %v938 = vunpack.c.l.b16 %v903
      %v939 = vunpack.c.l.b16 %v904
      %v940 = vunpack.c.l.b16 %v905
      %v941 = vunpack.c.l.b16 %v906
      %v942 = vpack.c.b16 %v930, %v929
      %v943 = vpack.c.b16 %v932, %v931
      %v944 = vpack.c.b16 %v934, %v933
      %v945 = vpack.c.b16 %v936, %v935
      %v946 = vpack.c.b16 %v938, %v937
      %v947 = vpack.c.b16 %v940, %v939
      %v948 = vpack.c.b16 %v941, %v941
      %v951 = vunpack.c.l.b16 %v914
      %v952 = vunpack.c.l.b16 %v915
      %v953 = vpack.c.b16 %v952, %v951
      %v956 = vsel %vm636, %v942, 0
      %v959 = vsel %vm636, %v943, 0
      %v962 = vsel %vm636, %v944, 0
      %v965 = vsel %vm636, %v945, 0
      %v968 = vsel %vm636, %v946, 0
      %v971 = vsel %vm636, %v947, 0
      %v974 = vsel %vm636, %v948, 0
      %976 = vmatprep.subr.bf16.mxu0 0
      %977 = vmatpush1.bf16.msra.mxu0 0
      %978 = vmatprep.subr.bf16.mxu0 0
      %979 = vmatpush1.bf16.msra.mxu0 0
      %980 = vmatprep.subr.bf16.mxu0 0
      %981 = vmatpush1.bf16.msra.mxu0 0
      %982 = vmatprep.subr.bf16.mxu0 0
      %983 = vmatpush1.bf16.msra.mxu0 0
      %984 = vmatprep.subr.bf16.mxu0 0
      %985 = vmatpush1.bf16.msra.mxu0 0
      %986 = vmatprep.subr.bf16.mxu0 0
      %987 = vmatpush1.bf16.msra.mxu0 0
      %988 = vmatprep.subr.bf16.mxu0 0
      %989 = vmatpush1.bf16.msra.mxu0 0
      %990 = vmatprep.subr.bf16.mxu0 0
      %991 = vmatpush1.bf16.msra.mxu0 %v953
      %992 = vmatprep.subr.bf16.mxu0 0
      %993 = vmatpush2.bf16.msra.mxu0 0
      %994 = vmatprep.subr.bf16.mxu0 0
      %995 = vmatpush2.bf16.msra.mxu0 0
      %996 = vmatprep.subr.bf16.mxu0 0
      %997 = vmatpush2.bf16.msra.mxu0 0
      %998 = vmatprep.subr.bf16.mxu0 0
      %999 = vmatpush2.bf16.msra.mxu0 0
      %1000 = vmatprep.subr.bf16.mxu0 0
      %1001 = vmatpush2.bf16.msra.mxu0 0
      %1002 = vmatprep.subr.bf16.mxu0 0
      %1003 = vmatpush2.bf16.msra.mxu0 0
      %1004 = vmatprep.subr.bf16.mxu0 0
      %1005 = vmatpush2.bf16.msra.mxu0 0
      %1006 = vmatprep.subr.bf16.mxu0 0
      %1007 = vmatpush2.bf16.msra.mxu0 0
      %1008 = vmatprep.mubr.bf16.mxu0 0
      %1009 = vmatmul.mubr.bf16.gmra.mxu0 %v956
      %v1010 = vpop.f32.mrf.mxu0
      %v1011 = vadd.f32 0.0, %v1010
      %v1012 = vpop.f32.mrf.mxu0
      %v1013 = vpop.f32.mrf.mxu0
      %v1014 = vadd.f32 0.0, %v1013
      %v1015 = vpop.f32.mrf.mxu0
      %1016 = vmatprep.mubr.bf16.mxu0 0
      %1017 = vmatmul.mubr.bf16.gmra.mxu0 %v959
      %v1018 = vpop.f32.mrf.mxu0
      %v1019 = vadd.f32 0.0, %v1018
      %v1020 = vpop.f32.mrf.mxu0
      %v1021 = vpop.f32.mrf.mxu0
      %v1022 = vadd.f32 0.0, %v1021
      %v1023 = vpop.f32.mrf.mxu0
      %1024 = vmatprep.mubr.bf16.mxu0 0
      %1025 = vmatmul.mubr.bf16.gmra.mxu0 %v962
      %v1026 = vpop.f32.mrf.mxu0
      %v1027 = vadd.f32 0.0, %v1026
      %v1028 = vpop.f32.mrf.mxu0
      %v1029 = vpop.f32.mrf.mxu0
      %v1030 = vadd.f32 0.0, %v1029
      %v1031 = vpop.f32.mrf.mxu0
      %1032 = vmatprep.mubr.bf16.mxu0 0
      %1033 = vmatmul.mubr.bf16.gmra.mxu0 %v965
      %v1034 = vpop.f32.mrf.mxu0
      %v1035 = vadd.f32 0.0, %v1034
      %v1036 = vpop.f32.mrf.mxu0
      %v1037 = vpop.f32.mrf.mxu0
      %v1038 = vadd.f32 0.0, %v1037
      %v1039 = vpop.f32.mrf.mxu0
      %1040 = vmatprep.mubr.bf16.mxu0 0
      %1041 = vmatmul.mubr.bf16.gmra.mxu0 %v968
      %v1042 = vpop.f32.mrf.mxu0
      %v1043 = vadd.f32 0.0, %v1042
      %v1044 = vpop.f32.mrf.mxu0
      %v1045 = vpop.f32.mrf.mxu0
      %v1046 = vadd.f32 0.0, %v1045
      %v1047 = vpop.f32.mrf.mxu0
      %1048 = vmatprep.mubr.bf16.mxu0 0
      %1049 = vmatmul.mubr.bf16.gmra.mxu0 %v971
      %v1050 = vpop.f32.mrf.mxu0
      %v1051 = vadd.f32 0.0, %v1050
      %v1052 = vpop.f32.mrf.mxu0
      %v1053 = vpop.f32.mrf.mxu0
      %v1054 = vadd.f32 0.0, %v1053
      %v1055 = vpop.f32.mrf.mxu0
      %1056 = vmatprep.mubr.bf16.mxu0 0
      %1057 = vmatmul.mubr.bf16.gmra.mxu0 %v974
      %v1058 = vpop.f32.mrf.mxu0
      %v1059 = vadd.f32 0.0, %v1058
      %v1060 = vpop.f32.mrf.mxu0
      %v1061 = vpop.f32.mrf.mxu0
      %v1062 = vpop.f32.mrf.mxu0
      %1063 = vdwg.mxu0
      %v1064 = vadd.f32 %v841, %v1011
      %v1065 = vadd.f32 %v844, %v1014
      %v1066 = vadd.f32 %v849, %v1019
      %v1067 = vadd.f32 %v852, %v1022
      %v1068 = vadd.f32 %v857, %v1027
      %v1069 = vadd.f32 %v860, %v1030
      %v1070 = vadd.f32 %v865, %v1035
      %v1071 = vadd.f32 %v868, %v1038
      %v1072 = vadd.f32 %v873, %v1043
      %v1073 = vadd.f32 %v876, %v1046
      %v1074 = vadd.f32 %v881, %v1051
      %v1075 = vadd.f32 %v884, %v1054
      %v1076 = vadd.f32 %v889, %v1059
      %v1077 = vld [vmem:[%s4] sm:$0xff]
      %v1078 = vld [vmem:[%s4 + $0x8] sm:$0xff]
      %v1079 = vld [vmem:[%s4 + $0x10] sm:$0xff]
      %v1080 = vld [vmem:[%s4 + $0x18] sm:$0xff]
      %v1081 = vld [vmem:[%s4 + $0x20] sm:$0xff]
      %v1082 = vld [vmem:[%s4 + $0x28] sm:$0xff]
      %v1083 = vld [vmem:[%s4 + $0x30] sm:$0xff]
      %v1084 = vld [vmem:[%s4 + $0x38] sm:$0xff]
      %v1085 = vld [vmem:[%s4 + $0x40] sm:$0xff]
      %v1086 = vld [vmem:[%s4 + $0x48] sm:$0xff]
      %v1087 = vld [vmem:[%s4 + $0x50] sm:$0xff]
      %v1088 = vld [vmem:[%s4 + $0x58] sm:$0xff]
      %v1089 = vld [vmem:[%s4 + $0x60] sm:$0xff]
      %v1090 = vadd.f32 %v1064, %v1077
      %v1091 = vadd.f32 %v1065, %v1078
      %v1092 = vadd.f32 %v1066, %v1079
      %v1093 = vadd.f32 %v1067, %v1080
      %v1094 = vadd.f32 %v1068, %v1081
      %v1095 = vadd.f32 %v1069, %v1082
      %v1096 = vadd.f32 %v1070, %v1083
      %v1097 = vadd.f32 %v1071, %v1084
      %v1098 = vadd.f32 %v1072, %v1085
      %v1099 = vadd.f32 %v1073, %v1086
      %v1100 = vadd.f32 %v1074, %v1087
      %v1101 = vadd.f32 %v1075, %v1088
      %v1102 = vadd.f32 %v1076, %v1089
      %v1103 = vmax.f32 %v1090, 0.0
      %v1104 = vmax.f32 %v1091, 0.0
      %v1105 = vmax.f32 %v1092, 0.0
      %v1106 = vmax.f32 %v1093, 0.0
      %v1107 = vmax.f32 %v1094, 0.0
      %v1108 = vmax.f32 %v1095, 0.0
      %v1109 = vmax.f32 %v1096, 0.0
      %v1110 = vmax.f32 %v1097, 0.0
      %v1111 = vmax.f32 %v1098, 0.0
      %v1112 = vmax.f32 %v1099, 0.0
      %v1113 = vmax.f32 %v1100, 0.0
      %v1114 = vmax.f32 %v1101, 0.0
      %v1115 = vmax.f32 %v1102, 0.0
      %v1116 = vpack.c.bf16 %v1104, %v1103
      %v1117 = vpack.c.bf16 %v1106, %v1105
      %v1118 = vpack.c.bf16 %v1108, %v1107
      %v1119 = vpack.c.bf16 %v1110, %v1109
      %v1120 = vpack.c.bf16 %v1112, %v1111
      %v1121 = vpack.c.bf16 %v1114, %v1113
      %v1122 = vpack.c.bf16 %v1115, %v1115
      %v1130 = vunpack.c.l.b16 %v1116
      %v1131 = vunpack.c.h.b16 %v1116
      %v1132 = vunpack.c.l.b16 %v1117
      %v1133 = vunpack.c.h.b16 %v1117
      %v1134 = vunpack.c.l.b16 %v1118
      %v1135 = vunpack.c.h.b16 %v1118
      %v1136 = vunpack.c.l.b16 %v1119
      %v1137 = vunpack.c.h.b16 %v1119
      %v1138 = vunpack.c.l.b16 %v1120
      %v1139 = vunpack.c.h.b16 %v1120
      %v1140 = vunpack.c.l.b16 %v1121
      %v1141 = vunpack.c.h.b16 %v1121
      %v1142 = vunpack.c.l.b16 %v1122
      %v1143 = vpack.c.b16 %v1130, %v1130
      %v1144 = vpack.c.b16 %v1131, %v1131
      %v1145 = vpack.c.b16 %v1132, %v1132
      %v1146 = vpack.c.b16 %v1133, %v1133
      %v1147 = vpack.c.b16 %v1134, %v1134
      %v1148 = vpack.c.b16 %v1135, %v1135
      %v1149 = vpack.c.b16 %v1136, %v1136
      %v1150 = vpack.c.b16 %v1137, %v1137
      %v1151 = vpack.c.b16 %v1138, %v1138
      %v1152 = vpack.c.b16 %v1139, %v1139
      %v1153 = vpack.c.b16 %v1140, %v1140
      %v1154 = vpack.c.b16 %v1141, %v1141
      %v1155 = vpack.c.b16 %v1142, %v1142
      %vm1169 = vcmask 27648
      %1170 = vst.msk [vmem:[#allocation2] sm:$0xf] %vm1169, %v1143
      %1171 = vst.msk [vmem:[#allocation2 + $0x4] sm:$0xf] %vm1169, %v1144
      %1172 = vst.msk [vmem:[#allocation2 + $0x8] sm:$0xf] %vm1169, %v1145
      %1173 = vst.msk [vmem:[#allocation2 + $0xc] sm:$0xf] %vm1169, %v1146
      %1174 = vst.msk [vmem:[#allocation2 + $0x10] sm:$0xf] %vm1169, %v1147
      %1175 = vst.msk [vmem:[#allocation2 + $0x14] sm:$0xf] %vm1169, %v1148
      %1176 = vst.msk [vmem:[#allocation2 + $0x18] sm:$0xf] %vm1169, %v1149
      %1177 = vst.msk [vmem:[#allocation2 + $0x1c] sm:$0xf] %vm1169, %v1150
      %1178 = vst.msk [vmem:[#allocation2 + $0x20] sm:$0xf] %vm1169, %v1151
      %1179 = vst.msk [vmem:[#allocation2 + $0x24] sm:$0xf] %vm1169, %v1152
      %1180 = vst.msk [vmem:[#allocation2 + $0x28] sm:$0xf] %vm1169, %v1153
      %1181 = vst.msk [vmem:[#allocation2 + $0x2c] sm:$0xf] %vm1169, %v1154
      %1182 = vst.msk [vmem:[#allocation2 + $0x30] sm:$0xf] %vm1169, %v1155
      %v1183 = vld [vmem:[#allocation2] sm:$0xf]
      %v1184 = vld [vmem:[#allocation2 + $0x4] sm:$0xf]
      %v1185 = vld [vmem:[#allocation2 + $0x8] sm:$0xf]
      %v1186 = vld [vmem:[#allocation2 + $0xc] sm:$0xf]
      %v1187 = vld [vmem:[#allocation2 + $0x10] sm:$0xf]
      %v1188 = vld [vmem:[#allocation2 + $0x14] sm:$0xf]
      %v1189 = vld [vmem:[#allocation2 + $0x18] sm:$0xf]
      %v1190 = vld [vmem:[#allocation2 + $0x1c] sm:$0xf]
      %v1191 = vld [vmem:[#allocation2 + $0x20] sm:$0xf]
      %v1192 = vld [vmem:[#allocation2 + $0x24] sm:$0xf]
      %1193 = vst.msk [vmem:[#allocation3] sm:$0xf] %vm1169, %v1183
      %1194 = vst.msk [vmem:[#allocation3 + $0x4] sm:$0xf] %vm1169, %v1184
      %1195 = vst.msk [vmem:[#allocation3 + $0x8] sm:$0xf] %vm1169, %v1185
      %1196 = vst.msk [vmem:[#allocation3 + $0xc] sm:$0xf] %vm1169, %v1186
      %1197 = vst.msk [vmem:[#allocation3 + $0x10] sm:$0xf] %vm1169, %v1187
      %1198 = vst.msk [vmem:[#allocation3 + $0x14] sm:$0xf] %vm1169, %v1188
      %1199 = vst.msk [vmem:[#allocation3 + $0x18] sm:$0xf] %vm1169, %v1189
      %1200 = vst.msk [vmem:[#allocation3 + $0x1c] sm:$0xf] %vm1169, %v1190
      %1201 = vst.msk [vmem:[#allocation3 + $0x20] sm:$0xf] %vm1169, %v1191
      %1202 = vst.msk [vmem:[#allocation3 + $0x24] sm:$0xf] %vm1169, %v1192
      %v1203 = vld [vmem:[#allocation2] sm:$0xf]
      %v1204 = vld [vmem:[#allocation2 + $0x4] sm:$0xf]
      %v1205 = vld [vmem:[#allocation2 + $0x8] sm:$0xf]
      %v1206 = vld [vmem:[#allocation2 + $0xc] sm:$0xf]
      %v1207 = vld [vmem:[#allocation2 + $0x10] sm:$0xf]
      %v1208 = vld [vmem:[#allocation2 + $0x14] sm:$0xf]
      %v1209 = vld [vmem:[#allocation2 + $0x18] sm:$0xf]
      %v1210 = vld [vmem:[#allocation2 + $0x1c] sm:$0xf]
      %v1211 = vld [vmem:[#allocation2 + $0x20] sm:$0xf]
      %v1212 = vld [vmem:[#allocation2 + $0x24] sm:$0xf]
      %v1213 = vld [vmem:[#allocation2 + $0x28] sm:$0x1]
      %vm1214 = vsmask.f32 3328
      %vm1215 = vsmask.f32 7440
      %vm1216 = vmor %vm1214, %vm1215
      %v1218 = vshrl.u32 %v1203, 16
      %v1220 = vrot.slane %v1218, 4
      %v1221 = vshll.u32 %v1203, 16
      %v1223 = vrot.slane %v1221, 5
      %v1224 = vor.u32 %v1220, %v1223
      %v1225 = vrot.slane %v1224, 4
      %v1227 = vshll.u32 %v1204, 16
      %v1229 = vrot.slane %v1227, 5
      %v1230 = vsel %vm1216, %v1225, %v1229
      %v1231 = vshrl.u32 %v1204, 16
      %v1233 = vrot.slane %v1231, 4
      %v1234 = vor.u32 %v1233, %v1229
      %v1235 = vrot.slane %v1234, 4
      %v1237 = vshll.u32 %v1205, 16
      %v1239 = vrot.slane %v1237, 5
      %v1240 = vsel %vm1216, %v1235, %v1239
      %v1241 = vshrl.u32 %v1205, 16
      %v1243 = vrot.slane %v1241, 4
      %v1244 = vor.u32 %v1243, %v1239
      %v1245 = vrot.slane %v1244, 4
      %v1247 = vshll.u32 %v1206, 16
      %v1249 = vrot.slane %v1247, 5
      %v1250 = vsel %vm1216, %v1245, %v1249
      %v1251 = vshrl.u32 %v1206, 16
      %v1253 = vrot.slane %v1251, 4
      %v1254 = vor.u32 %v1253, %v1249
      %v1255 = vrot.slane %v1254, 4
      %v1257 = vshll.u32 %v1207, 16
      %v1259 = vrot.slane %v1257, 5
      %v1260 = vsel %vm1216, %v1255, %v1259
      %v1261 = vshrl.u32 %v1207, 16
      %v1263 = vrot.slane %v1261, 4
      %v1264 = vor.u32 %v1263, %v1259
      %v1265 = vrot.slane %v1264, 4
      %v1267 = vshll.u32 %v1208, 16
      %v1269 = vrot.slane %v1267, 5
      %v1270 = vsel %vm1216, %v1265, %v1269
      %v1271 = vshrl.u32 %v1208, 16
      %v1273 = vrot.slane %v1271, 4
      %v1274 = vor.u32 %v1273, %v1269
      %v1275 = vrot.slane %v1274, 4
      %v1277 = vshll.u32 %v1209, 16
      %v1279 = vrot.slane %v1277, 5
      %v1280 = vsel %vm1216, %v1275, %v1279
      %v1281 = vshrl.u32 %v1209, 16
      %v1283 = vrot.slane %v1281, 4
      %v1284 = vor.u32 %v1283, %v1279
      %v1285 = vrot.slane %v1284, 4
      %v1287 = vshll.u32 %v1210, 16
      %v1289 = vrot.slane %v1287, 5
      %v1290 = vsel %vm1216, %v1285, %v1289
      %v1291 = vshrl.u32 %v1210, 16
      %v1293 = vrot.slane %v1291, 4
      %v1294 = vor.u32 %v1293, %v1289
      %v1295 = vrot.slane %v1294, 4
      %v1297 = vshll.u32 %v1211, 16
      %v1299 = vrot.slane %v1297, 5
      %v1300 = vsel %vm1216, %v1295, %v1299
      %v1301 = vshrl.u32 %v1211, 16
      %v1303 = vrot.slane %v1301, 4
      %v1304 = vor.u32 %v1303, %v1299
      %v1305 = vrot.slane %v1304, 4
      %v1307 = vshll.u32 %v1212, 16
      %v1309 = vrot.slane %v1307, 5
      %v1310 = vsel %vm1216, %v1305, %v1309
      %v1311 = vshrl.u32 %v1212, 16
      %v1313 = vrot.slane %v1311, 4
      %v1314 = vor.u32 %v1313, %v1309
      %v1315 = vrot.slane %v1314, 4
      %v1317 = vshll.u32 %v1213, 16
      %v1319 = vrot.slane %v1317, 5
      %v1320 = vsel %vm1216, %v1315, %v1319
      %1321 = vrot.lane.b32.xlu0 %v1230, 4
      %v1322 = vpop.permute.xlu0 %1321
      %1323 = vrot.lane.b32.xlu0 %v1240, 4
      %v1324 = vpop.permute.xlu0 %1323
      %1325 = vrot.lane.b32.xlu0 %v1250, 4
      %v1326 = vpop.permute.xlu0 %1325
      %1327 = vrot.lane.b32.xlu0 %v1260, 4
      %v1328 = vpop.permute.xlu0 %1327
      %1329 = vrot.lane.b32.xlu0 %v1270, 4
      %v1330 = vpop.permute.xlu0 %1329
      %1331 = vrot.lane.b32.xlu0 %v1280, 4
      %v1332 = vpop.permute.xlu0 %1331
      %1333 = vrot.lane.b32.xlu0 %v1290, 4
      %v1334 = vpop.permute.xlu0 %1333
      %1335 = vrot.lane.b32.xlu0 %v1300, 4
      %v1336 = vpop.permute.xlu0 %1335
      %1337 = vrot.lane.b32.xlu0 %v1310, 4
      %v1338 = vpop.permute.xlu0 %1337
      %1339 = vrot.lane.b32.xlu0 %v1320, 4
      %v1340 = vpop.permute.xlu0 %1339
      %vm1351 = vcmask 60448
      %1352 = vst.msk [vmem:[#allocation3] sm:$0xf] %vm1351, %v1322
      %1353 = vst.msk [vmem:[#allocation3 + $0x4] sm:$0xf] %vm1351, %v1324
      %1354 = vst.msk [vmem:[#allocation3 + $0x8] sm:$0xf] %vm1351, %v1326
      %1355 = vst.msk [vmem:[#allocation3 + $0xc] sm:$0xf] %vm1351, %v1328
      %1356 = vst.msk [vmem:[#allocation3 + $0x10] sm:$0xf] %vm1351, %v1330
      %1357 = vst.msk [vmem:[#allocation3 + $0x14] sm:$0xf] %vm1351, %v1332
      %1358 = vst.msk [vmem:[#allocation3 + $0x18] sm:$0xf] %vm1351, %v1334
      %1359 = vst.msk [vmem:[#allocation3 + $0x1c] sm:$0xf] %vm1351, %v1336
      %1360 = vst.msk [vmem:[#allocation3 + $0x20] sm:$0xf] %vm1351, %v1338
      %1361 = vst.msk [vmem:[#allocation3 + $0x24] sm:$0xf] %vm1351, %v1340
      %v1362 = vld [vmem:[#allocation2] sm:$0xe]
      %v1363 = vld [vmem:[#allocation2 + $0x4] sm:$0xf]
      %v1364 = vld [vmem:[#allocation2 + $0x8] sm:$0xf]
      %v1365 = vld [vmem:[#allocation2 + $0xc] sm:$0xf]
      %v1366 = vld [vmem:[#allocation2 + $0x10] sm:$0xf]
      %v1367 = vld [vmem:[#allocation2 + $0x14] sm:$0xf]
      %v1368 = vld [vmem:[#allocation2 + $0x18] sm:$0xf]
      %v1369 = vld [vmem:[#allocation2 + $0x1c] sm:$0xf]
      %v1370 = vld [vmem:[#allocation2 + $0x20] sm:$0xf]
      %v1371 = vld [vmem:[#allocation2 + $0x24] sm:$0xf]
      %v1372 = vld [vmem:[#allocation2 + $0x28] sm:$0x1]
      %vm1384 = vcmask 1042432
      %vm1385 = vcmask 1046532
      %vm1386 = vmor %vm1384, %vm1385
      %v1387 = vrot.slane %v1362, 5
      %v1388 = vrot.slane %v1387, 4
      %v1389 = vrot.slane %v1363, 5
      %v1390 = vsel %vm1386, %v1388, %v1389
      %v1391 = vrot.slane %v1389, 4
      %v1392 = vrot.slane %v1364, 5
      %v1393 = vsel %vm1386, %v1391, %v1392
      %v1394 = vrot.slane %v1392, 4
      %v1395 = vrot.slane %v1365, 5
      %v1396 = vsel %vm1386, %v1394, %v1395
      %v1397 = vrot.slane %v1395, 4
      %v1398 = vrot.slane %v1366, 5
      %v1399 = vsel %vm1386, %v1397, %v1398
      %v1400 = vrot.slane %v1398, 4
      %v1401 = vrot.slane %v1367, 5
      %v1402 = vsel %vm1386, %v1400, %v1401
      %v1403 = vrot.slane %v1401, 4
      %v1404 = vrot.slane %v1368, 5
      %v1405 = vsel %vm1386, %v1403, %v1404
      %v1406 = vrot.slane %v1404, 4
      %v1407 = vrot.slane %v1369, 5
      %v1408 = vsel %vm1386, %v1406, %v1407
      %v1409 = vrot.slane %v1407, 4
      %v1410 = vrot.slane %v1370, 5
      %v1411 = vsel %vm1386, %v1409, %v1410
      %v1412 = vrot.slane %v1410, 4
      %v1413 = vrot.slane %v1371, 5
      %v1414 = vsel %vm1386, %v1412, %v1413
      %v1415 = vrot.slane %v1413, 4
      %v1416 = vrot.slane %v1372, 5
      %v1417 = vsel %vm1386, %v1415, %v1416
      %1418 = vrot.lane.b32.xlu0 %v1390, 8
      %v1419 = vpop.permute.xlu0 %1418
      %1420 = vrot.lane.b32.xlu0 %v1393, 8
      %v1421 = vpop.permute.xlu0 %1420
      %1422 = vrot.lane.b32.xlu0 %v1396, 8
      %v1423 = vpop.permute.xlu0 %1422
      %1424 = vrot.lane.b32.xlu0 %v1399, 8
      %v1425 = vpop.permute.xlu0 %1424
      %1426 = vrot.lane.b32.xlu0 %v1402, 8
      %v1427 = vpop.permute.xlu0 %1426
      %1428 = vrot.lane.b32.xlu0 %v1405, 8
      %v1429 = vpop.permute.xlu0 %1428
      %1430 = vrot.lane.b32.xlu0 %v1408, 8
      %v1431 = vpop.permute.xlu0 %1430
      %1432 = vrot.lane.b32.xlu0 %v1411, 8
      %v1433 = vpop.permute.xlu0 %1432
      %1434 = vrot.lane.b32.xlu0 %v1414, 8
      %v1435 = vpop.permute.xlu0 %1434
      %1436 = vrot.lane.b32.xlu0 %v1417, 8
      %v1437 = vpop.permute.xlu0 %1436
      %vm1448 = vcmask 93248
      %1449 = vst.msk [vmem:[#allocation3] sm:$0xf] %vm1448, %v1419
      %1450 = vst.msk [vmem:[#allocation3 + $0x4] sm:$0xf] %vm1448, %v1421
      %1451 = vst.msk [vmem:[#allocation3 + $0x8] sm:$0xf] %vm1448, %v1423
      %1452 = vst.msk [vmem:[#allocation3 + $0xc] sm:$0xf] %vm1448, %v1425
      %1453 = vst.msk [vmem:[#allocation3 + $0x10] sm:$0xf] %vm1448, %v1427
      %1454 = vst.msk [vmem:[#allocation3 + $0x14] sm:$0xf] %vm1448, %v1429
      %1455 = vst.msk [vmem:[#allocation3 + $0x18] sm:$0xf] %vm1448, %v1431
      %1456 = vst.msk [vmem:[#allocation3 + $0x1c] sm:$0xf] %vm1448, %v1433
      %1457 = vst.msk [vmem:[#allocation3 + $0x20] sm:$0xf] %vm1448, %v1435
      %1458 = vst.msk [vmem:[#allocation3 + $0x24] sm:$0xf] %vm1448, %v1437
      %v1459 = vld [vmem:[#allocation2 + $0x4] sm:$0xe]
      %v1460 = vld [vmem:[#allocation2 + $0x8] sm:$0xf]
      %v1461 = vld [vmem:[#allocation2 + $0xc] sm:$0xf]
      %v1462 = vld [vmem:[#allocation2 + $0x10] sm:$0xf]
      %v1463 = vld [vmem:[#allocation2 + $0x14] sm:$0xf]
      %v1464 = vld [vmem:[#allocation2 + $0x18] sm:$0xf]
      %v1465 = vld [vmem:[#allocation2 + $0x1c] sm:$0xf]
      %v1466 = vld [vmem:[#allocation2 + $0x20] sm:$0xf]
      %v1467 = vld [vmem:[#allocation2 + $0x24] sm:$0xf]
      %v1468 = vld [vmem:[#allocation2 + $0x28] sm:$0xf]
      %v1469 = vld [vmem:[#allocation2 + $0x2c] sm:$0x1]
      %v1481 = vrot.slane %v1459, 5
      %v1482 = vrot.slane %v1481, 4
      %v1483 = vrot.slane %v1460, 5
      %v1484 = vsel %vm1386, %v1482, %v1483
      %v1485 = vrot.slane %v1483, 4
      %v1486 = vrot.slane %v1461, 5
      %v1487 = vsel %vm1386, %v1485, %v1486
      %v1488 = vrot.slane %v1486, 4
      %v1489 = vrot.slane %v1462, 5
      %v1490 = vsel %vm1386, %v1488, %v1489
      %v1491 = vrot.slane %v1489, 4
      %v1492 = vrot.slane %v1463, 5
      %v1493 = vsel %vm1386, %v1491, %v1492
      %v1494 = vrot.slane %v1492, 4
      %v1495 = vrot.slane %v1464, 5
      %v1496 = vsel %vm1386, %v1494, %v1495
      %v1497 = vrot.slane %v1495, 4
      %v1498 = vrot.slane %v1465, 5
      %v1499 = vsel %vm1386, %v1497, %v1498
      %v1500 = vrot.slane %v1498, 4
      %v1501 = vrot.slane %v1466, 5
      %v1502 = vsel %vm1386, %v1500, %v1501
      %v1503 = vrot.slane %v1501, 4
      %v1504 = vrot.slane %v1467, 5
      %v1505 = vsel %vm1386, %v1503, %v1504
      %v1506 = vrot.slane %v1504, 4
      %v1507 = vrot.slane %v1468, 5
      %v1508 = vsel %vm1386, %v1506, %v1507
      %v1509 = vrot.slane %v1507, 4
      %v1510 = vrot.slane %v1469, 5
      %v1511 = vsel %vm1386, %v1509, %v1510
      %1512 = vrot.lane.b32.xlu0 %v1484, 12
      %v1513 = vpop.permute.xlu0 %1512
      %1514 = vrot.lane.b32.xlu0 %v1487, 12
      %v1515 = vpop.permute.xlu0 %1514
      %1516 = vrot.lane.b32.xlu0 %v1490, 12
      %v1517 = vpop.permute.xlu0 %1516
      %1518 = vrot.lane.b32.xlu0 %v1493, 12
      %v1519 = vpop.permute.xlu0 %1518
      %1520 = vrot.lane.b32.xlu0 %v1496, 12
      %v1521 = vpop.permute.xlu0 %1520
      %1522 = vrot.lane.b32.xlu0 %v1499, 12
      %v1523 = vpop.permute.xlu0 %1522
      %1524 = vrot.lane.b32.xlu0 %v1502, 12
      %v1525 = vpop.permute.xlu0 %1524
      %1526 = vrot.lane.b32.xlu0 %v1505, 12
      %v1527 = vpop.permute.xlu0 %1526
      %1528 = vrot.lane.b32.xlu0 %v1508, 12
      %v1529 = vpop.permute.xlu0 %1528
      %1530 = vrot.lane.b32.xlu0 %v1511, 12
      %v1531 = vpop.permute.xlu0 %1530
      %vm1542 = vcmask 126048
      %1543 = vst.msk [vmem:[#allocation3] sm:$0xf] %vm1542, %v1513
      %1544 = vst.msk [vmem:[#allocation3 + $0x4] sm:$0xf] %vm1542, %v1515
      %1545 = vst.msk [vmem:[#allocation3 + $0x8] sm:$0xf] %vm1542, %v1517
      %1546 = vst.msk [vmem:[#allocation3 + $0xc] sm:$0xf] %vm1542, %v1519
      %1547 = vst.msk [vmem:[#allocation3 + $0x10] sm:$0xf] %vm1542, %v1521
      %1548 = vst.msk [vmem:[#allocation3 + $0x14] sm:$0xf] %vm1542, %v1523
      %1549 = vst.msk [vmem:[#allocation3 + $0x18] sm:$0xf] %vm1542, %v1525
      %1550 = vst.msk [vmem:[#allocation3 + $0x1c] sm:$0xf] %vm1542, %v1527
      %1551 = vst.msk [vmem:[#allocation3 + $0x20] sm:$0xf] %vm1542, %v1529
      %1552 = vst.msk [vmem:[#allocation3 + $0x24] sm:$0xf] %vm1542, %v1531
      %v1553 = vld [vmem:[#allocation2 + $0x4] sm:$0xe]
      %v1554 = vld [vmem:[#allocation2 + $0x8] sm:$0xf]
      %v1555 = vld [vmem:[#allocation2 + $0xc] sm:$0xf]
      %v1556 = vld [vmem:[#allocation2 + $0x10] sm:$0xf]
      %v1557 = vld [vmem:[#allocation2 + $0x14] sm:$0xf]
      %v1558 = vld [vmem:[#allocation2 + $0x18] sm:$0xf]
      %v1559 = vld [vmem:[#allocation2 + $0x1c] sm:$0xf]
      %v1560 = vld [vmem:[#allocation2 + $0x20] sm:$0xf]
      %v1561 = vld [vmem:[#allocation2 + $0x24] sm:$0xf]
      %v1562 = vld [vmem:[#allocation2 + $0x28] sm:$0xf]
      %v1563 = vld [vmem:[#allocation2 + $0x2c] sm:$0x3]
      %vm1564 = vsmask.f32 2304
      %vm1565 = vsmask.f32 6416
      %vm1566 = vmor %vm1564, %vm1565
      %v1568 = vshrl.u32 %v1553, 16
      %v1570 = vrot.slane %v1568, 5
      %v1571 = vshll.u32 %v1553, 16
      %v1573 = vrot.slane %v1571, 6
      %v1574 = vor.u32 %v1570, %v1573
      %v1575 = vrot.slane %v1574, 4
      %v1577 = vshrl.u32 %v1554, 16
      %v1579 = vrot.slane %v1577, 5
      %v1580 = vshll.u32 %v1554, 16
      %v1582 = vrot.slane %v1580, 6
      %v1583 = vor.u32 %v1579, %v1582
      %v1584 = vsel %vm1566, %v1575, %v1583
      %v1585 = vrot.slane %v1583, 4
      %v1587 = vshrl.u32 %v1555, 16
      %v1589 = vrot.slane %v1587, 5
      %v1590 = vshll.u32 %v1555, 16
      %v1592 = vrot.slane %v1590, 6
      %v1593 = vor.u32 %v1589, %v1592
      %v1594 = vsel %vm1566, %v1585, %v1593
      %v1595 = vrot.slane %v1593, 4
      %v1597 = vshrl.u32 %v1556, 16
      %v1599 = vrot.slane %v1597, 5
      %v1600 = vshll.u32 %v1556, 16
      %v1602 = vrot.slane %v1600, 6
      %v1603 = vor.u32 %v1599, %v1602
      %v1604 = vsel %vm1566, %v1595, %v1603
      %v1605 = vrot.slane %v1603, 4
      %v1607 = vshrl.u32 %v1557, 16
      %v1609 = vrot.slane %v1607, 5
      %v1610 = vshll.u32 %v1557, 16
      %v1612 = vrot.slane %v1610, 6
      %v1613 = vor.u32 %v1609, %v1612
      %v1614 = vsel %vm1566, %v1605, %v1613
      %v1615 = vrot.slane %v1613, 4
      %v1617 = vshrl.u32 %v1558, 16
      %v1619 = vrot.slane %v1617, 5
      %v1620 = vshll.u32 %v1558, 16
      %v1622 = vrot.slane %v1620, 6
      %v1623 = vor.u32 %v1619, %v1622
      %v1624 = vsel %vm1566, %v1615, %v1623
      %v1625 = vrot.slane %v1623, 4
      %v1627 = vshrl.u32 %v1559, 16
      %v1629 = vrot.slane %v1627, 5
      %v1630 = vshll.u32 %v1559, 16
      %v1632 = vrot.slane %v1630, 6
      %v1633 = vor.u32 %v1629, %v1632
      %v1634 = vsel %vm1566, %v1625, %v1633
      %v1635 = vrot.slane %v1633, 4
      %v1637 = vshrl.u32 %v1560, 16
      %v1639 = vrot.slane %v1637, 5
      %v1640 = vshll.u32 %v1560, 16
      %v1642 = vrot.slane %v1640, 6
      %v1643 = vor.u32 %v1639, %v1642
      %v1644 = vsel %vm1566, %v1635, %v1643
      %v1645 = vrot.slane %v1643, 4
      %v1647 = vshrl.u32 %v1561, 16
      %v1649 = vrot.slane %v1647, 5
      %v1650 = vshll.u32 %v1561, 16
      %v1652 = vrot.slane %v1650, 6
      %v1653 = vor.u32 %v1649, %v1652
      %v1654 = vsel %vm1566, %v1645, %v1653
      %v1655 = vrot.slane %v1653, 4
      %v1657 = vshrl.u32 %v1562, 16
      %v1659 = vrot.slane %v1657, 5
      %v1660 = vshll.u32 %v1562, 16
      %v1662 = vrot.slane %v1660, 6
      %v1663 = vor.u32 %v1659, %v1662
      %v1664 = vsel %vm1566, %v1655, %v1663
      %v1665 = vrot.slane %v1663, 4
      %v1667 = vshrl.u32 %v1563, 16
      %v1669 = vrot.slane %v1667, 5
      %v1670 = vshll.u32 %v1563, 16
      %v1672 = vrot.slane %v1670, 6
      %v1673 = vor.u32 %v1669, %v1672
      %v1674 = vsel %vm1566, %v1665, %v1673
      %1675 = vrot.lane.b32.xlu0 %v1584, 16
      %v1676 = vpop.permute.xlu0 %1675
      %1677 = vrot.lane.b32.xlu0 %v1594, 16
      %v1678 = vpop.permute.xlu0 %1677
      %1679 = vrot.lane.b32.xlu0 %v1604, 16
      %v1680 = vpop.permute.xlu0 %1679
      %1681 = vrot.lane.b32.xlu0 %v1614, 16
      %v1682 = vpop.permute.xlu0 %1681
      %1683 = vrot.lane.b32.xlu0 %v1624, 16
      %v1684 = vpop.permute.xlu0 %1683
      %1685 = vrot.lane.b32.xlu0 %v1634, 16
      %v1686 = vpop.permute.xlu0 %1685
      %1687 = vrot.lane.b32.xlu0 %v1644, 16
      %v1688 = vpop.permute.xlu0 %1687
      %1689 = vrot.lane.b32.xlu0 %v1654, 16
      %v1690 = vpop.permute.xlu0 %1689
      %1691 = vrot.lane.b32.xlu0 %v1664, 16
      %v1692 = vpop.permute.xlu0 %1691
      %1693 = vrot.lane.b32.xlu0 %v1674, 16
      %v1694 = vpop.permute.xlu0 %1693
      %vm1705 = vcmask 158848
      %1706 = vst.msk [vmem:[#allocation3] sm:$0xf] %vm1705, %v1676
      %1707 = vst.msk [vmem:[#allocation3 + $0x4] sm:$0xf] %vm1705, %v1678
      %1708 = vst.msk [vmem:[#allocation3 + $0x8] sm:$0xf] %vm1705, %v1680
      %1709 = vst.msk [vmem:[#allocation3 + $0xc] sm:$0xf] %vm1705, %v1682
      %1710 = vst.msk [vmem:[#allocation3 + $0x10] sm:$0xf] %vm1705, %v1684
      %1711 = vst.msk [vmem:[#allocation3 + $0x14] sm:$0xf] %vm1705, %v1686
      %1712 = vst.msk [vmem:[#allocation3 + $0x18] sm:$0xf] %vm1705, %v1688
      %1713 = vst.msk [vmem:[#allocation3 + $0x1c] sm:$0xf] %vm1705, %v1690
      %1714 = vst.msk [vmem:[#allocation3 + $0x20] sm:$0xf] %vm1705, %v1692
      %1715 = vst.msk [vmem:[#allocation3 + $0x24] sm:$0xf] %vm1705, %v1694
      %v1716 = vld [vmem:[#allocation2 + $0x4] sm:$0xc]
      %v1717 = vld [vmem:[#allocation2 + $0x8] sm:$0xf]
      %v1718 = vld [vmem:[#allocation2 + $0xc] sm:$0xf]
      %v1719 = vld [vmem:[#allocation2 + $0x10] sm:$0xf]
      %v1720 = vld [vmem:[#allocation2 + $0x14] sm:$0xf]
      %v1721 = vld [vmem:[#allocation2 + $0x18] sm:$0xf]
      %v1722 = vld [vmem:[#allocation2 + $0x1c] sm:$0xf]
      %v1723 = vld [vmem:[#allocation2 + $0x20] sm:$0xf]
      %v1724 = vld [vmem:[#allocation2 + $0x24] sm:$0xf]
      %v1725 = vld [vmem:[#allocation2 + $0x28] sm:$0xf]
      %v1726 = vld [vmem:[#allocation2 + $0x2c] sm:$0x3]
      %vm1738 = vcmask 1041408
      %vm1739 = vcmask 1045508
      %vm1740 = vmor %vm1738, %vm1739
      %v1741 = vrot.slane %v1716, 6
      %v1742 = vrot.slane %v1741, 4
      %v1743 = vrot.slane %v1717, 6
      %v1744 = vsel %vm1740, %v1742, %v1743
      %v1745 = vrot.slane %v1743, 4
      %v1746 = vrot.slane %v1718, 6
      %v1747 = vsel %vm1740, %v1745, %v1746
      %v1748 = vrot.slane %v1746, 4
      %v1749 = vrot.slane %v1719, 6
      %v1750 = vsel %vm1740, %v1748, %v1749
      %v1751 = vrot.slane %v1749, 4
      %v1752 = vrot.slane %v1720, 6
      %v1753 = vsel %vm1740, %v1751, %v1752
      %v1754 = vrot.slane %v1752, 4
      %v1755 = vrot.slane %v1721, 6
      %v1756 = vsel %vm1740, %v1754, %v1755
      %v1757 = vrot.slane %v1755, 4
      %v1758 = vrot.slane %v1722, 6
      %v1759 = vsel %vm1740, %v1757, %v1758
      %v1760 = vrot.slane %v1758, 4
      %v1761 = vrot.slane %v1723, 6
      %v1762 = vsel %vm1740, %v1760, %v1761
      %v1763 = vrot.slane %v1761, 4
      %v1764 = vrot.slane %v1724, 6
      %v1765 = vsel %vm1740, %v1763, %v1764
      %v1766 = vrot.slane %v1764, 4
      %v1767 = vrot.slane %v1725, 6
      %v1768 = vsel %vm1740, %v1766, %v1767
      %v1769 = vrot.slane %v1767, 4
      %v1770 = vrot.slane %v1726, 6
      %v1771 = vsel %vm1740, %v1769, %v1770
      %1772 = vrot.lane.b32.xlu0 %v1744, 20
      %v1773 = vpop.permute.xlu0 %1772
      %1774 = vrot.lane.b32.xlu0 %v1747, 20
      %v1775 = vpop.permute.xlu0 %1774
      %1776 = vrot.lane.b32.xlu0 %v1750, 20
      %v1777 = vpop.permute.xlu0 %1776
      %1778 = vrot.lane.b32.xlu0 %v1753, 20
      %v1779 = vpop.permute.xlu0 %1778
      %1780 = vrot.lane.b32.xlu0 %v1756, 20
      %v1781 = vpop.permute.xlu0 %1780
      %1782 = vrot.lane.b32.xlu0 %v1759, 20
      %v1783 = vpop.permute.xlu0 %1782
      %1784 = vrot.lane.b32.xlu0 %v1762, 20
      %v1785 = vpop.permute.xlu0 %1784
      %1786 = vrot.lane.b32.xlu0 %v1765, 20
      %v1787 = vpop.permute.xlu0 %1786
      %1788 = vrot.lane.b32.xlu0 %v1768, 20
      %v1789 = vpop.permute.xlu0 %1788
      %1790 = vrot.lane.b32.xlu0 %v1771, 20
      %v1791 = vpop.permute.xlu0 %1790
      %vm1802 = vcmask 191648
      %1803 = vst.msk [vmem:[#allocation3] sm:$0xf] %vm1802, %v1773
      %1804 = vst.msk [vmem:[#allocation3 + $0x4] sm:$0xf] %vm1802, %v1775
      %1805 = vst.msk [vmem:[#allocation3 + $0x8] sm:$0xf] %vm1802, %v1777
      %1806 = vst.msk [vmem:[#allocation3 + $0xc] sm:$0xf] %vm1802, %v1779
      %1807 = vst.msk [vmem:[#allocation3 + $0x10] sm:$0xf] %vm1802, %v1781
      %1808 = vst.msk [vmem:[#allocation3 + $0x14] sm:$0xf] %vm1802, %v1783
      %1809 = vst.msk [vmem:[#allocation3 + $0x18] sm:$0xf] %vm1802, %v1785
      %1810 = vst.msk [vmem:[#allocation3 + $0x1c] sm:$0xf] %vm1802, %v1787
      %1811 = vst.msk [vmem:[#allocation3 + $0x20] sm:$0xf] %vm1802, %v1789
      %1812 = vst.msk [vmem:[#allocation3 + $0x24] sm:$0xf] %vm1802, %v1791
      %v1813 = vld [vmem:[#allocation2 + $0x8] sm:$0xc]
      %v1814 = vld [vmem:[#allocation2 + $0xc] sm:$0xf]
      %v1815 = vld [vmem:[#allocation2 + $0x10] sm:$0xf]
      %v1816 = vld [vmem:[#allocation2 + $0x14] sm:$0xf]
      %v1817 = vld [vmem:[#allocation2 + $0x18] sm:$0xf]
      %v1818 = vld [vmem:[#allocation2 + $0x1c] sm:$0xf]
      %v1819 = vld [vmem:[#allocation2 + $0x20] sm:$0xf]
      %v1820 = vld [vmem:[#allocation2 + $0x24] sm:$0xf]
      %v1821 = vld [vmem:[#allocation2 + $0x28] sm:$0xf]
      %v1822 = vld [vmem:[#allocation2 + $0x2c] sm:$0xf]
      %v1823 = vld [vmem:[#allocation2 + $0x30] sm:$0x3]
      %v1835 = vrot.slane %v1813, 6
      %v1836 = vrot.slane %v1835, 4
      %v1837 = vrot.slane %v1814, 6
      %v1838 = vsel %vm1740, %v1836, %v1837
      %v1839 = vrot.slane %v1837, 4
      %v1840 = vrot.slane %v1815, 6
      %v1841 = vsel %vm1740, %v1839, %v1840
      %v1842 = vrot.slane %v1840, 4
      %v1843 = vrot.slane %v1816, 6
      %v1844 = vsel %vm1740, %v1842, %v1843
      %v1845 = vrot.slane %v1843, 4
      %v1846 = vrot.slane %v1817, 6
      %v1847 = vsel %vm1740, %v1845, %v1846
      %v1848 = vrot.slane %v1846, 4
      %v1849 = vrot.slane %v1818, 6
      %v1850 = vsel %vm1740, %v1848, %v1849
      %v1851 = vrot.slane %v1849, 4
      %v1852 = vrot.slane %v1819, 6
      %v1853 = vsel %vm1740, %v1851, %v1852
      %v1854 = vrot.slane %v1852, 4
      %v1855 = vrot.slane %v1820, 6
      %v1856 = vsel %vm1740, %v1854, %v1855
      %v1857 = vrot.slane %v1855, 4
      %v1858 = vrot.slane %v1821, 6
      %v1859 = vsel %vm1740, %v1857, %v1858
      %v1860 = vrot.slane %v1858, 4
      %v1861 = vrot.slane %v1822, 6
      %v1862 = vsel %vm1740, %v1860, %v1861
      %v1863 = vrot.slane %v1861, 4
      %v1864 = vrot.slane %v1823, 6
      %v1865 = vsel %vm1740, %v1863, %v1864
      %1866 = vrot.lane.b32.xlu0 %v1838, 24
      %v1867 = vpop.permute.xlu0 %1866
      %1868 = vrot.lane.b32.xlu0 %v1841, 24
      %v1869 = vpop.permute.xlu0 %1868
      %1870 = vrot.lane.b32.xlu0 %v1844, 24
      %v1871 = vpop.permute.xlu0 %1870
      %1872 = vrot.lane.b32.xlu0 %v1847, 24
      %v1873 = vpop.permute.xlu0 %1872
      %1874 = vrot.lane.b32.xlu0 %v1850, 24
      %v1875 = vpop.permute.xlu0 %1874
      %1876 = vrot.lane.b32.xlu0 %v1853, 24
      %v1877 = vpop.permute.xlu0 %1876
      %1878 = vrot.lane.b32.xlu0 %v1856, 24
      %v1879 = vpop.permute.xlu0 %1878
      %1880 = vrot.lane.b32.xlu0 %v1859, 24
      %v1881 = vpop.permute.xlu0 %1880
      %1882 = vrot.lane.b32.xlu0 %v1862, 24
      %v1883 = vpop.permute.xlu0 %1882
      %1884 = vrot.lane.b32.xlu0 %v1865, 24
      %v1885 = vpop.permute.xlu0 %1884
      %vm1896 = vcmask 224448
      %1897 = vst.msk [vmem:[#allocation3] sm:$0xf] %vm1896, %v1867
      %1898 = vst.msk [vmem:[#allocation3 + $0x4] sm:$0xf] %vm1896, %v1869
      %1899 = vst.msk [vmem:[#allocation3 + $0x8] sm:$0xf] %vm1896, %v1871
      %1900 = vst.msk [vmem:[#allocation3 + $0xc] sm:$0xf] %vm1896, %v1873
      %1901 = vst.msk [vmem:[#allocation3 + $0x10] sm:$0xf] %vm1896, %v1875
      %1902 = vst.msk [vmem:[#allocation3 + $0x14] sm:$0xf] %vm1896, %v1877
      %1903 = vst.msk [vmem:[#allocation3 + $0x18] sm:$0xf] %vm1896, %v1879
      %1904 = vst.msk [vmem:[#allocation3 + $0x1c] sm:$0xf] %vm1896, %v1881
      %1905 = vst.msk [vmem:[#allocation3 + $0x20] sm:$0xf] %vm1896, %v1883
      %1906 = vst.msk [vmem:[#allocation3 + $0x24] sm:$0xf] %vm1896, %v1885
      %v1907 = vld [vmem:[#allocation2 + $0x8] sm:$0xc]
      %v1908 = vld [vmem:[#allocation2 + $0xc] sm:$0xf]
      %v1909 = vld [vmem:[#allocation2 + $0x10] sm:$0xf]
      %v1910 = vld [vmem:[#allocation2 + $0x14] sm:$0xf]
      %v1911 = vld [vmem:[#allocation2 + $0x18] sm:$0xf]
      %v1912 = vld [vmem:[#allocation2 + $0x1c] sm:$0xf]
      %v1913 = vld [vmem:[#allocation2 + $0x20] sm:$0xf]
      %v1914 = vld [vmem:[#allocation2 + $0x24] sm:$0xf]
      %v1915 = vld [vmem:[#allocation2 + $0x28] sm:$0xf]
      %v1916 = vld [vmem:[#allocation2 + $0x2c] sm:$0xf]
      %v1917 = vld [vmem:[#allocation2 + $0x30] sm:$0x7]
      %vm1918 = vsmask.f32 1280
      %vm1919 = vsmask.f32 5392
      %vm1920 = vmor %vm1918, %vm1919
      %v1922 = vshrl.u32 %v1907, 16
      %v1924 = vrot.slane %v1922, 6
      %v1925 = vshll.u32 %v1907, 16
      %v1927 = vrot.slane %v1925, 7
      %v1928 = vor.u32 %v1924, %v1927
      %v1929 = vrot.slane %v1928, 4
      %v1931 = vshrl.u32 %v1908, 16
      %v1933 = vrot.slane %v1931, 6
      %v1934 = vshll.u32 %v1908, 16
      %v1936 = vrot.slane %v1934, 7
      %v1937 = vor.u32 %v1933, %v1936
      %v1938 = vsel %vm1920, %v1929, %v1937
      %v1939 = vrot.slane %v1937, 4
      %v1941 = vshrl.u32 %v1909, 16
      %v1943 = vrot.slane %v1941, 6
      %v1944 = vshll.u32 %v1909, 16
      %v1946 = vrot.slane %v1944, 7
      %v1947 = vor.u32 %v1943, %v1946
      %v1948 = vsel %vm1920, %v1939, %v1947
      %v1949 = vrot.slane %v1947, 4
      %v1951 = vshrl.u32 %v1910, 16
      %v1953 = vrot.slane %v1951, 6
      %v1954 = vshll.u32 %v1910, 16
      %v1956 = vrot.slane %v1954, 7
      %v1957 = vor.u32 %v1953, %v1956
      %v1958 = vsel %vm1920, %v1949, %v1957
      %v1959 = vrot.slane %v1957, 4
      %v1961 = vshrl.u32 %v1911, 16
      %v1963 = vrot.slane %v1961, 6
      %v1964 = vshll.u32 %v1911, 16
      %v1966 = vrot.slane %v1964, 7
      %v1967 = vor.u32 %v1963, %v1966
      %v1968 = vsel %vm1920, %v1959, %v1967
      %v1969 = vrot.slane %v1967, 4
      %v1971 = vshrl.u32 %v1912, 16
      %v1973 = vrot.slane %v1971, 6
      %v1974 = vshll.u32 %v1912, 16
      %v1976 = vrot.slane %v1974, 7
      %v1977 = vor.u32 %v1973, %v1976
      %v1978 = vsel %vm1920, %v1969, %v1977
      %v1979 = vrot.slane %v1977, 4
      %v1981 = vshrl.u32 %v1913, 16
      %v1983 = vrot.slane %v1981, 6
      %v1984 = vshll.u32 %v1913, 16
      %v1986 = vrot.slane %v1984, 7
      %v1987 = vor.u32 %v1983, %v1986
      %v1988 = vsel %vm1920, %v1979, %v1987
      %v1989 = vrot.slane %v1987, 4
      %v1991 = vshrl.u32 %v1914, 16
      %v1993 = vrot.slane %v1991, 6
      %v1994 = vshll.u32 %v1914, 16
      %v1996 = vrot.slane %v1994, 7
      %v1997 = vor.u32 %v1993, %v1996
      %v1998 = vsel %vm1920, %v1989, %v1997
      %v1999 = vrot.slane %v1997, 4
      %v2001 = vshrl.u32 %v1915, 16
      %v2003 = vrot.slane %v2001, 6
      %v2004 = vshll.u32 %v1915, 16
      %v2006 = vrot.slane %v2004, 7
      %v2007 = vor.u32 %v2003, %v2006
      %v2008 = vsel %vm1920, %v1999, %v2007
      %v2009 = vrot.slane %v2007, 4
      %v2011 = vshrl.u32 %v1916, 16
      %v2013 = vrot.slane %v2011, 6
      %v2014 = vshll.u32 %v1916, 16
      %v2016 = vrot.slane %v2014, 7
      %v2017 = vor.u32 %v2013, %v2016
      %v2018 = vsel %vm1920, %v2009, %v2017
      %v2019 = vrot.slane %v2017, 4
      %v2021 = vshrl.u32 %v1917, 16
      %v2023 = vrot.slane %v2021, 6
      %v2024 = vshll.u32 %v1917, 16
      %v2026 = vrot.slane %v2024, 7
      %v2027 = vor.u32 %v2023, %v2026
      %v2028 = vsel %vm1920, %v2019, %v2027
      %2029 = vrot.lane.b32.xlu0 %v1938, 28
      %v2030 = vpop.permute.xlu0 %2029
      %2031 = vrot.lane.b32.xlu0 %v1948, 28
      %v2032 = vpop.permute.xlu0 %2031
      %2033 = vrot.lane.b32.xlu0 %v1958, 28
      %v2034 = vpop.permute.xlu0 %2033
      %2035 = vrot.lane.b32.xlu0 %v1968, 28
      %v2036 = vpop.permute.xlu0 %2035
      %2037 = vrot.lane.b32.xlu0 %v1978, 28
      %v2038 = vpop.permute.xlu0 %2037
      %2039 = vrot.lane.b32.xlu0 %v1988, 28
      %v2040 = vpop.permute.xlu0 %2039
      %2041 = vrot.lane.b32.xlu0 %v1998, 28
      %v2042 = vpop.permute.xlu0 %2041
      %2043 = vrot.lane.b32.xlu0 %v2008, 28
      %v2044 = vpop.permute.xlu0 %2043
      %2045 = vrot.lane.b32.xlu0 %v2018, 28
      %v2046 = vpop.permute.xlu0 %2045
      %2047 = vrot.lane.b32.xlu0 %v2028, 28
      %v2048 = vpop.permute.xlu0 %2047
      %vm2059 = vcmask 257248
      %2060 = vst.msk [vmem:[#allocation3] sm:$0xf] %vm2059, %v2030
      %2061 = vst.msk [vmem:[#allocation3 + $0x4] sm:$0xf] %vm2059, %v2032
      %2062 = vst.msk [vmem:[#allocation3 + $0x8] sm:$0xf] %vm2059, %v2034
      %2063 = vst.msk [vmem:[#allocation3 + $0xc] sm:$0xf] %vm2059, %v2036
      %2064 = vst.msk [vmem:[#allocation3 + $0x10] sm:$0xf] %vm2059, %v2038
      %2065 = vst.msk [vmem:[#allocation3 + $0x14] sm:$0xf] %vm2059, %v2040
      %2066 = vst.msk [vmem:[#allocation3 + $0x18] sm:$0xf] %vm2059, %v2042
      %2067 = vst.msk [vmem:[#allocation3 + $0x1c] sm:$0xf] %vm2059, %v2044
      %2068 = vst.msk [vmem:[#allocation3 + $0x20] sm:$0xf] %vm2059, %v2046
      %2069 = vst.msk [vmem:[#allocation3 + $0x24] sm:$0xf] %vm2059, %v2048
      %v2070 = vld [vmem:[#allocation2 + $0x8] sm:$0x8]
      %v2071 = vld [vmem:[#allocation2 + $0xc] sm:$0xf]
      %v2072 = vld [vmem:[#allocation2 + $0x10] sm:$0xf]
      %v2073 = vld [vmem:[#allocation2 + $0x14] sm:$0xf]
      %v2074 = vld [vmem:[#allocation2 + $0x18] sm:$0xf]
      %v2075 = vld [vmem:[#allocation2 + $0x1c] sm:$0xf]
      %v2076 = vld [vmem:[#allocation2 + $0x20] sm:$0xf]
      %v2077 = vld [vmem:[#allocation2 + $0x24] sm:$0xf]
      %v2078 = vld [vmem:[#allocation2 + $0x28] sm:$0xf]
      %v2079 = vld [vmem:[#allocation2 + $0x2c] sm:$0xf]
      %v2080 = vld [vmem:[#allocation2 + $0x30] sm:$0x7]
      %vm2092 = vcmask 1040384
      %vm2093 = vcmask 1044484
      %vm2094 = vmor %vm2092, %vm2093
      %v2095 = vrot.slane %v2070, 7
      %v2096 = vrot.slane %v2095, 4
      %v2097 = vrot.slane %v2071, 7
      %v2098 = vsel %vm2094, %v2096, %v2097
      %v2099 = vrot.slane %v2097, 4
      %v2100 = vrot.slane %v2072, 7
      %v2101 = vsel %vm2094, %v2099, %v2100
      %v2102 = vrot.slane %v2100, 4
      %v2103 = vrot.slane %v2073, 7
      %v2104 = vsel %vm2094, %v2102, %v2103
      %v2105 = vrot.slane %v2103, 4
      %v2106 = vrot.slane %v2074, 7
      %v2107 = vsel %vm2094, %v2105, %v2106
      %v2108 = vrot.slane %v2106, 4
      %v2109 = vrot.slane %v2075, 7
      %v2110 = vsel %vm2094, %v2108, %v2109
      %v2111 = vrot.slane %v2109, 4
      %v2112 = vrot.slane %v2076, 7
      %v2113 = vsel %vm2094, %v2111, %v2112
      %v2114 = vrot.slane %v2112, 4
      %v2115 = vrot.slane %v2077, 7
      %v2116 = vsel %vm2094, %v2114, %v2115
      %v2117 = vrot.slane %v2115, 4
      %v2118 = vrot.slane %v2078, 7
      %v2119 = vsel %vm2094, %v2117, %v2118
      %v2120 = vrot.slane %v2118, 4
      %v2121 = vrot.slane %v2079, 7
      %v2122 = vsel %vm2094, %v2120, %v2121
      %v2123 = vrot.slane %v2121, 4
      %v2124 = vrot.slane %v2080, 7
      %v2125 = vsel %vm2094, %v2123, %v2124
      %2126 = vrot.lane.b32.xlu0 %v2098, 32
      %v2127 = vpop.permute.xlu0 %2126
      %2128 = vrot.lane.b32.xlu0 %v2101, 32
      %v2129 = vpop.permute.xlu0 %2128
      %2130 = vrot.lane.b32.xlu0 %v2104, 32
      %v2131 = vpop.permute.xlu0 %2130
      %2132 = vrot.lane.b32.xlu0 %v2107, 32
      %v2133 = vpop.permute.xlu0 %2132
      %2134 = vrot.lane.b32.xlu0 %v2110, 32
      %v2135 = vpop.permute.xlu0 %2134
      %2136 = vrot.lane.b32.xlu0 %v2113, 32
      %v2137 = vpop.permute.xlu0 %2136
      %2138 = vrot.lane.b32.xlu0 %v2116, 32
      %v2139 = vpop.permute.xlu0 %2138
      %2140 = vrot.lane.b32.xlu0 %v2119, 32
      %v2141 = vpop.permute.xlu0 %2140
      %2142 = vrot.lane.b32.xlu0 %v2122, 32
      %v2143 = vpop.permute.xlu0 %2142
      %2144 = vrot.lane.b32.xlu0 %v2125, 32
      %v2145 = vpop.permute.xlu0 %2144
      %vm2156 = vcmask 290048
      %2157 = vst.msk [vmem:[#allocation3] sm:$0xf] %vm2156, %v2127
      %2158 = vst.msk [vmem:[#allocation3 + $0x4] sm:$0xf] %vm2156, %v2129
      %2159 = vst.msk [vmem:[#allocation3 + $0x8] sm:$0xf] %vm2156, %v2131
      %2160 = vst.msk [vmem:[#allocation3 + $0xc] sm:$0xf] %vm2156, %v2133
      %2161 = vst.msk [vmem:[#allocation3 + $0x10] sm:$0xf] %vm2156, %v2135
      %2162 = vst.msk [vmem:[#allocation3 + $0x14] sm:$0xf] %vm2156, %v2137
      %2163 = vst.msk [vmem:[#allocation3 + $0x18] sm:$0xf] %vm2156, %v2139
      %2164 = vst.msk [vmem:[#allocation3 + $0x1c] sm:$0xf] %vm2156, %v2141
      %2165 = vst.msk [vmem:[#allocation3 + $0x20] sm:$0xf] %vm2156, %v2143
      %2166 = vst.msk [vmem:[#allocation3 + $0x24] sm:$0xf] %vm2156, %v2145
      %v2167 = vld [vmem:[#allocation3] sm:$0xf]
      %v2168 = vld [vmem:[#allocation3 + $0x4] sm:$0xf]
      %v2169 = vld [vmem:[#allocation3 + $0x8] sm:$0xf]
      %v2170 = vld [vmem:[#allocation3 + $0xc] sm:$0xf]
      %v2171 = vld [vmem:[#allocation3 + $0x10] sm:$0xf]
      %v2172 = vld [vmem:[#allocation3 + $0x14] sm:$0xf]
      %v2173 = vld [vmem:[#allocation3 + $0x18] sm:$0xf]
      %v2174 = vld [vmem:[#allocation3 + $0x1c] sm:$0xf]
      %v2175 = vld [vmem:[#allocation3 + $0x20] sm:$0xf]
      %v2176 = vld [vmem:[#allocation3 + $0x24] sm:$0xf]
      %v2177 = vld [vmem:[%s5] sm:$0xf]
      %v2178 = vld [vmem:[%s5 + $0x4] sm:$0xf]
      %v2179 = vld [vmem:[%s5 + $0x8] sm:$0xf]
      %v2180 = vld [vmem:[%s5 + $0xc] sm:$0xf]
      %v2181 = vld [vmem:[%s5 + $0x10] sm:$0x3]
      %v2182 = vld [vmem:[%s6] sm:$0x1]
      %v2184 = vlaneseq
      %v2185 = vshrl.u32 %v2184, 7
      %v2186 = vsub.s32 0, %v2185
      %v2187 = vrot.slane %v2182, %v2186
      %v2199 = vunpack.c.l.b16 %v2167
      %v2200 = vunpack.c.l.b16 %v2168
      %v2201 = vunpack.c.l.b16 %v2169
      %v2202 = vunpack.c.l.b16 %v2170
      %v2203 = vunpack.c.l.b16 %v2171
      %v2204 = vunpack.c.l.b16 %v2172
      %v2205 = vunpack.c.l.b16 %v2173
      %v2206 = vunpack.c.l.b16 %v2174
      %v2207 = vunpack.c.l.b16 %v2175
      %v2208 = vunpack.c.l.b16 %v2176
      %v2209 = vpack.c.b16 %v2200, %v2199
      %v2210 = vpack.c.b16 %v2202, %v2201
      %v2211 = vpack.c.b16 %v2204, %v2203
      %v2212 = vpack.c.b16 %v2206, %v2205
      %v2213 = vpack.c.b16 %v2208, %v2207
      %v2219 = vunpack.c.l.b16 %v2177
      %v2220 = vunpack.c.l.b16 %v2178
      %v2221 = vunpack.c.l.b16 %v2179
      %v2222 = vunpack.c.l.b16 %v2180
      %v2223 = vunpack.c.l.b16 %v2181
      %v2224 = vpack.c.b16 %v2220, %v2219
      %v2225 = vpack.c.b16 %v2222, %v2221
      %v2226 = vpack.c.b16 %v2223, %v2223
      %vm2229 = vcmask 293888
      %v2231 = vsel %vm2229, %v2209, 0
      %v2234 = vsel %vm2229, %v2210, 0
      %v2237 = vsel %vm2229, %v2211, 0
      %v2240 = vsel %vm2229, %v2212, 0
      %v2243 = vsel %vm2229, %v2213, 0
      %vm2245 = vcmask 1041408
      %v2247 = vsel %vm2245, %v2226, 0
      %2249 = vmatprep.subr.bf16.mxu0 0
      %2250 = vmatpush1.bf16.msra.mxu0 0
      %2251 = vmatprep.subr.bf16.mxu0 0
      %2252 = vmatpush1.bf16.msra.mxu0 0
      %2253 = vmatprep.subr.bf16.mxu0 0
      %2254 = vmatpush1.bf16.msra.mxu0 0
      %2255 = vmatprep.subr.bf16.mxu0 0
      %2256 = vmatpush1.bf16.msra.mxu0 0
      %2257 = vmatprep.subr.bf16.mxu0 0
      %2258 = vmatpush1.bf16.msra.mxu0 0
      %2259 = vmatprep.subr.bf16.mxu0 0
      %2260 = vmatpush1.bf16.msra.mxu0 %v2247
      %2261 = vmatprep.subr.bf16.mxu0 0
      %2262 = vmatpush1.bf16.msra.mxu0 %v2225
      %2263 = vmatprep.subr.bf16.mxu0 0
      %2264 = vmatpush1.bf16.msra.mxu0 %v2224
      %2265 = vmatprep.subr.bf16.mxu0 0
      %2266 = vmatpush2.bf16.msra.mxu0 0
      %2267 = vmatprep.subr.bf16.mxu0 0
      %2268 = vmatpush2.bf16.msra.mxu0 0
      %2269 = vmatprep.subr.bf16.mxu0 0
      %2270 = vmatpush2.bf16.msra.mxu0 0
      %2271 = vmatprep.subr.bf16.mxu0 0
      %2272 = vmatpush2.bf16.msra.mxu0 0
      %2273 = vmatprep.subr.bf16.mxu0 0
      %2274 = vmatpush2.bf16.msra.mxu0 0
      %2275 = vmatprep.subr.bf16.mxu0 0
      %2276 = vmatpush2.bf16.msra.mxu0 0
      %2277 = vmatprep.subr.bf16.mxu0 0
      %2278 = vmatpush2.bf16.msra.mxu0 0
      %2279 = vmatprep.subr.bf16.mxu0 0
      %2280 = vmatpush2.bf16.msra.mxu0 0
      %2281 = vmatprep.mubr.bf16.mxu0 0
      %2282 = vmatmul.mubr.bf16.gmra.mxu0 %v2231
      %v2283 = vpop.f32.mrf.mxu0
      %v2284 = vadd.f32 %v2187, %v2283
      %v2285 = vpop.f32.mrf.mxu0
      %v2286 = vpop.f32.mrf.mxu0
      %v2287 = vadd.f32 %v2187, %v2286
      %v2288 = vpop.f32.mrf.mxu0
      %2289 = vmatprep.mubr.bf16.mxu0 0
      %2290 = vmatmul.mubr.bf16.gmra.mxu0 %v2234
      %v2291 = vpop.f32.mrf.mxu0
      %v2292 = vadd.f32 %v2187, %v2291
      %v2293 = vpop.f32.mrf.mxu0
      %v2294 = vpop.f32.mrf.mxu0
      %v2295 = vadd.f32 %v2187, %v2294
      %v2296 = vpop.f32.mrf.mxu0
      %2297 = vmatprep.mubr.bf16.mxu0 0
      %2298 = vmatmul.mubr.bf16.gmra.mxu0 %v2237
      %v2299 = vpop.f32.mrf.mxu0
      %v2300 = vadd.f32 %v2187, %v2299
      %v2301 = vpop.f32.mrf.mxu0
      %v2302 = vpop.f32.mrf.mxu0
      %v2303 = vadd.f32 %v2187, %v2302
      %v2304 = vpop.f32.mrf.mxu0
      %2305 = vmatprep.mubr.bf16.mxu0 0
      %2306 = vmatmul.mubr.bf16.gmra.mxu0 %v2240
      %v2307 = vpop.f32.mrf.mxu0
      %v2308 = vadd.f32 %v2187, %v2307
      %v2309 = vpop.f32.mrf.mxu0
      %v2310 = vpop.f32.mrf.mxu0
      %v2311 = vadd.f32 %v2187, %v2310
      %v2312 = vpop.f32.mrf.mxu0
      %2313 = vmatprep.mubr.bf16.mxu0 0
      %2314 = vmatmul.mubr.bf16.gmra.mxu0 %v2243
      %v2315 = vpop.f32.mrf.mxu0
      %v2316 = vadd.f32 %v2187, %v2315
      %v2317 = vpop.f32.mrf.mxu0
      %v2318 = vpop.f32.mrf.mxu0
      %v2319 = vadd.f32 %v2187, %v2318
      %v2320 = vpop.f32.mrf.mxu0
      %2321 = vdwg.mxu0
      %v2322 = vmax.f32 %v2284, 0.0
      %v2323 = vmax.f32 %v2287, 0.0
      %v2324 = vmax.f32 %v2292, 0.0
      %v2325 = vmax.f32 %v2295, 0.0
      %v2326 = vmax.f32 %v2300, 0.0
      %v2327 = vmax.f32 %v2303, 0.0
      %v2328 = vmax.f32 %v2308, 0.0
      %v2329 = vmax.f32 %v2311, 0.0
      %v2330 = vmax.f32 %v2316, 0.0
      %v2331 = vmax.f32 %v2319, 0.0
      %v2332 = vpack.c.bf16 %v2323, %v2322
      %v2333 = vpack.c.bf16 %v2325, %v2324
      %v2334 = vpack.c.bf16 %v2327, %v2326
      %v2335 = vpack.c.bf16 %v2329, %v2328
      %v2336 = vpack.c.bf16 %v2331, %v2330
      %v2337 = vld [vmem:[%s7] sm:$0x3]
      %v2338 = vld [vmem:[%s502 + $0x4] sm:$0xe]
      %v2339 = vld [vmem:[%s502 + $0x8] sm:$0xf]
      %v2340 = vld [vmem:[%s502 + $0xc] sm:$0xf]
      %v2341 = vld [vmem:[%s502 + $0x10] sm:$0xf]
      %v2342 = vld [vmem:[%s502 + $0x14] sm:$0xf]
      %v2343 = vld [vmem:[%s502 + $0x18] sm:$0xf]
      %v2344 = vld [vmem:[%s502 + $0x1c] sm:$0xf]
      %v2345 = vld [vmem:[%s502 + $0x20] sm:$0xf]
      %v2346 = vld [vmem:[%s502 + $0x24] sm:$0xf]
      %v2347 = vld [vmem:[%s502 + $0x28] sm:$0xf]
      %v2348 = vld [vmem:[%s502 + $0x2c] sm:$0x3]
      %v2349 = vunpack.c.l.bf16 %v2338
      %v2350 = vunpack.c.l.bf16 %v2339
      %v2351 = vunpack.c.l.bf16 %v2340
      %v2352 = vunpack.c.l.bf16 %v2341
      %v2353 = vunpack.c.l.bf16 %v2342
      %v2354 = vunpack.c.l.bf16 %v2343
      %v2355 = vunpack.c.l.bf16 %v2344
      %v2356 = vunpack.c.l.bf16 %v2345
      %v2357 = vunpack.c.l.bf16 %v2346
      %v2358 = vunpack.c.l.bf16 %v2347
      %v2359 = vunpack.c.l.bf16 %v2348
      %v2360 = vld [vmem:[%s8] sm:$0x1]
      %v2362 = vlaneseq
      %v2363 = vshrl.u32 %v2362, 7
      %v2364 = vsub.s32 0, %v2363
      %v2365 = vrot.slane %v2360, %v2364
      %vm2367 = vcmask 31744
      %v2369 = vsel %vm2367, %v2332, 0
      %v2372 = vsel %vm2367, %v2333, 0
      %v2375 = vsel %vm2367, %v2334, 0
      %v2378 = vsel %vm2367, %v2335, 0
      %v2381 = vsel %vm2367, %v2336, 0
      %v2384 = vsel %vm2245, %v2337, 0
      %2386 = vmatprep.subr.bf16.mxu0 0
      %2387 = vmatpush1.bf16.msra.mxu0 0
      %2388 = vmatprep.subr.bf16.mxu0 0
      %2389 = vmatpush1.bf16.msra.mxu0 0
      %2390 = vmatprep.subr.bf16.mxu0 0
      %2391 = vmatpush1.bf16.msra.mxu0 0
      %2392 = vmatprep.subr.bf16.mxu0 0
      %2393 = vmatpush1.bf16.msra.mxu0 0
      %2394 = vmatprep.subr.bf16.mxu0 0
      %2395 = vmatpush1.bf16.msra.mxu0 0
      %2396 = vmatprep.subr.bf16.mxu0 0
      %2397 = vmatpush1.bf16.msra.mxu0 0
      %2398 = vmatprep.subr.bf16.mxu0 0
      %2399 = vmatpush1.bf16.msra.mxu0 0
      %2400 = vmatprep.subr.bf16.mxu0 0
      %2401 = vmatpush1.bf16.msra.mxu0 %v2384
      %2402 = vmatprep.subr.bf16.mxu0 0
      %2403 = vmatpush2.bf16.msra.mxu0 0
      %2404 = vmatprep.subr.bf16.mxu0 0
      %2405 = vmatpush2.bf16.msra.mxu0 0
      %2406 = vmatprep.subr.bf16.mxu0 0
      %2407 = vmatpush2.bf16.msra.mxu0 0
      %2408 = vmatprep.subr.bf16.mxu0 0
      %2409 = vmatpush2.bf16.msra.mxu0 0
      %2410 = vmatprep.subr.bf16.mxu0 0
      %2411 = vmatpush2.bf16.msra.mxu0 0
      %2412 = vmatprep.subr.bf16.mxu0 0
      %2413 = vmatpush2.bf16.msra.mxu0 0
      %2414 = vmatprep.subr.bf16.mxu0 0
      %2415 = vmatpush2.bf16.msra.mxu0 0
      %2416 = vmatprep.subr.bf16.mxu0 0
      %2417 = vmatpush2.bf16.msra.mxu0 0
      %2418 = vmatprep.mubr.bf16.mxu0 0
      %2419 = vmatmul.mubr.bf16.gmra.mxu0 %v2369
      %v2420 = vpop.f32.mrf.mxu0
      %v2421 = vadd.f32 %v2365, %v2420
      %v2422 = vpop.f32.mrf.mxu0
      %v2423 = vpop.f32.mrf.mxu0
      %v2424 = vadd.f32 %v2365, %v2423
      %v2425 = vpop.f32.mrf.mxu0
      %2426 = vmatprep.mubr.bf16.mxu0 0
      %2427 = vmatmul.mubr.bf16.gmra.mxu0 %v2372
      %v2428 = vpop.f32.mrf.mxu0
      %v2429 = vadd.f32 %v2365, %v2428
      %v2430 = vpop.f32.mrf.mxu0
      %v2431 = vpop.f32.mrf.mxu0
      %v2432 = vadd.f32 %v2365, %v2431
      %v2433 = vpop.f32.mrf.mxu0
      %2434 = vmatprep.mubr.bf16.mxu0 0
      %2435 = vmatmul.mubr.bf16.gmra.mxu0 %v2375
      %v2436 = vpop.f32.mrf.mxu0
      %v2437 = vadd.f32 %v2365, %v2436
      %v2438 = vpop.f32.mrf.mxu0
      %v2439 = vpop.f32.mrf.mxu0
      %v2440 = vadd.f32 %v2365, %v2439
      %v2441 = vpop.f32.mrf.mxu0
      %2442 = vmatprep.mubr.bf16.mxu0 0
      %2443 = vmatmul.mubr.bf16.gmra.mxu0 %v2378
      %v2444 = vpop.f32.mrf.mxu0
      %v2445 = vadd.f32 %v2365, %v2444
      %v2446 = vpop.f32.mrf.mxu0
      %v2447 = vpop.f32.mrf.mxu0
      %v2448 = vadd.f32 %v2365, %v2447
      %v2449 = vpop.f32.mrf.mxu0
      %2450 = vmatprep.mubr.bf16.mxu0 0
      %2451 = vmatmul.mubr.bf16.gmra.mxu0 %v2381
      %v2452 = vpop.f32.mrf.mxu0
      %v2453 = vadd.f32 %v2365, %v2452
      %v2454 = vpop.f32.mrf.mxu0
      %v2455 = vpop.f32.mrf.mxu0
      %v2456 = vadd.f32 %v2365, %v2455
      %v2457 = vpop.f32.mrf.mxu0
      %2458 = vdwg.mxu0
      %vm2470 = vcmask 1044480
      %v2471 = vrot.slane %v2349, 3
      %v2472 = vrot.slane %v2350, 3
      %v2473 = vsel %vm2470, %v2471, %v2472
      %v2474 = vrot.slane %v2351, 3
      %v2475 = vsel %vm2470, %v2472, %v2474
      %v2476 = vrot.slane %v2352, 3
      %v2477 = vsel %vm2470, %v2474, %v2476
      %v2478 = vrot.slane %v2353, 3
      %v2479 = vsel %vm2470, %v2476, %v2478
      %v2480 = vrot.slane %v2354, 3
      %v2481 = vsel %vm2470, %v2478, %v2480
      %v2482 = vrot.slane %v2355, 3
      %v2483 = vsel %vm2470, %v2480, %v2482
      %v2484 = vrot.slane %v2356, 3
      %v2485 = vsel %vm2470, %v2482, %v2484
      %v2486 = vrot.slane %v2357, 3
      %v2487 = vsel %vm2470, %v2484, %v2486
      %v2488 = vrot.slane %v2358, 3
      %v2489 = vsel %vm2470, %v2486, %v2488
      %v2490 = vrot.slane %v2359, 3
      %v2491 = vsel %vm2470, %v2488, %v2490
      %v2502 = vadd.f32 %v2421, %v2473
      %v2503 = vadd.f32 %v2424, %v2475
      %v2504 = vadd.f32 %v2429, %v2477
      %v2505 = vadd.f32 %v2432, %v2479
      %v2506 = vadd.f32 %v2437, %v2481
      %v2507 = vadd.f32 %v2440, %v2483
      %v2508 = vadd.f32 %v2445, %v2485
      %v2509 = vadd.f32 %v2448, %v2487
      %v2510 = vadd.f32 %v2453, %v2489
      %v2511 = vadd.f32 %v2456, %v2491
      %v2512 = vmax.f32 %v2502, 0.0
      %v2513 = vmax.f32 %v2503, 0.0
      %v2514 = vmax.f32 %v2504, 0.0
      %v2515 = vmax.f32 %v2505, 0.0
      %v2516 = vmax.f32 %v2506, 0.0
      %v2517 = vmax.f32 %v2507, 0.0
      %v2518 = vmax.f32 %v2508, 0.0
      %v2519 = vmax.f32 %v2509, 0.0
      %v2520 = vmax.f32 %v2510, 0.0
      %v2521 = vmax.f32 %v2511, 0.0
      %2522 = vst.msk [vmem:[%s534] sm:$0xff] %vm636, %v2512
      %2523 = vst.msk [vmem:[%s534 + $0x8] sm:$0xff] %vm636, %v2513
      %2524 = vst.msk [vmem:[%s534 + $0x10] sm:$0xff] %vm636, %v2514
      %2525 = vst.msk [vmem:[%s534 + $0x18] sm:$0xff] %vm636, %v2515
      %2526 = vst.msk [vmem:[%s534 + $0x20] sm:$0xff] %vm636, %v2516
      %2527 = vst.msk [vmem:[%s534 + $0x28] sm:$0xff] %vm636, %v2517
      %2528 = vst.msk [vmem:[%s534 + $0x30] sm:$0xff] %vm636, %v2518
      %2529 = vst.msk [vmem:[%s534 + $0x38] sm:$0xff] %vm636, %v2519
      %2530 = vst.msk [vmem:[%s534 + $0x40] sm:$0xff] %vm636, %v2520
      %2531 = vst.msk [vmem:[%s534 + $0x48] sm:$0xff] %vm636, %v2521
      %p2532 = scmp.lt.s32.totalorder %s24, 1
      %s2533 = scalar_select %p2532, %s24, 1
      %p2534 = scmp.lt.s32.totalorder %s25, 3
      %s2535 = scalar_select %p2534, %s25, 3
      %s2536 = smul.addr %s2535, 10
      %s2537 = smul.addr %s2533, 40
      %s2538 = sadd.s32 %s2536, %s2537
      %s2539 = smul.addr %s2538, 8
      %s2540 = scalar_lea.vmem %s9, %s2539
      // Predicated region
      $region57: #{tpu_custom_call.1} parent=55 // pred_check
        %p2541 = pneg %p290
      $region58: #{tpu_custom_call.1} parent=55 // pred_check_branch
        %2543 = sbr.rel (%p2541) target = $region60
      $region59: #{tpu_custom_call.1} parent=55 // pred_region
        _
      $region60: #{tpu_custom_call.1} parent=55 // pred_fallthru
        _
    $region56: #{tpu_custom_call.1} parent=5 // pred_fallthru
      _
    %p2544 = scmp.le.s32.totalorder 2, %s15
    // Predicated region
    $region61: #{tpu_custom_call.1} parent=5 // pred_check
      %p2545 = pneg %p2544
    $region62: #{tpu_custom_call.1} parent=5 // pred_check_branch
      %2547 = sbr.rel (%p2545) target = $region64
    $region63: #{tpu_custom_call.1} parent=5 // pred_region
      %s2548 = ssub.s32 %s15, 2
      // Predicated region
      $region65: #{tpu_custom_call.1} parent=63 // pred_check
        %p2549 = pneg %p296
      $region66: #{tpu_custom_call.1} parent=63 // pred_check_branch
        %2551 = sbr.rel (%p2549) target = $region68
      $region67: #{tpu_custom_call.1} parent=63 // pred_region
        %p2552 = scmp.lt.s32.totalorder %s26, 1
        %s2553 = scalar_select %p2552, %s26, 1
        %p2554 = scmp.lt.s32.totalorder %s27, 3
        %s2555 = scalar_select %p2554, %s27, 3
        %s2556 = smul.addr %s2555, 10
        %s2557 = smul.addr %s2553, 40
        %s2558 = sadd.s32 %s2556, %s2557
        %s2559 = smul.addr %s2558, 8
        %s2560 = scalar_lea.vmem %s9, %s2559
      $region68: #{tpu_custom_call.1} parent=63 // pred_fallthru
        _
    $region64: #{tpu_custom_call.1} parent=5 // pred_fallthru
      _
  $region6: #{tpu_custom_call.1} parent=0 // loop_footer
    %s19 = sadd.s32 1, %s15
  $region7: #{tpu_custom_call.1} parent=0 // loop_footer_branch
    %14 = sbr.rel target = $region3
  $region8: #{tpu_custom_call.1} parent=0 // loop_exit
    _

</llo_original>
